<compile_context>
chip_gen: v7x
topology: tpu7x:2x2x1
jax: 0.10.0
libtpu: 0.0.40
codegen_flags: <defaults>
</compile_context>

<pallas_src>
import jax
import jax.numpy as jnp
from jax.experimental import pallas as pl
from jax.experimental.pallas import tpu as pltpu


def _round_up(v, m):
    return ((v + m - 1) // m) * m


def _vmem_capacity_bytes():
    """Physical per-core VMEM; conservative 64 MiB (v7x) if the query fails."""
    try:
        info = pltpu.get_tpu_info()
        for attr in ("vmem_capacity_bytes", "vmem_size_bytes", "vmem_bytes"):
            val = getattr(info, attr, None)
            if val:
                return int(val)
    except Exception:
        pass
    return 64 * 1024 * 1024


def _head_kernel(x_ref, w1_ref, s1_ref, t1_ref,
                 w2_ref, s2_ref, t2_ref,
                 w3_ref, b3_ref, o_ref, pool_ref):
    j = pl.program_id(1)

    @pl.when(j == 0)
    def _init():
        pool_ref[...] = jnp.zeros_like(pool_ref)

    # Partial global-average-pool: accumulate the raw SUM of this HW chunk over
    # the lane axis (1/HW is folded into s1).  XLU cross-lane reduce, normally
    # hidden under the x DMA; if a bundle dump ever shows the XLU slot binding,
    # switch this to a ones-vector matmul on the otherwise-idle MXU.
    pool_ref[...] += jnp.sum(x_ref[...].astype(jnp.float32), axis=2)

    @pl.when(j == pl.num_programs(1) - 1)
    def _finish():
        mm_dtype = w1_ref.dtype
        pooled = pool_ref[...].astype(mm_dtype)                         # (tn, F)

        # TODO(synk): Dropout(0.5) is identity in eval mode (not reproduced).

        # Linear1 + folded (BatchNorm1 ∘ bias ∘ 1/HW) + ReLU
        h1 = jnp.dot(pooled, w1_ref[...], preferred_element_type=jnp.float32)
        h1 = jnp.maximum(h1 * s1_ref[...] + t1_ref[...], 0.0)

        # Linear2 + folded (BatchNorm2 ∘ bias) + ReLU
        h2 = jnp.dot(h1.astype(mm_dtype), w2_ref[...],
                     preferred_element_type=jnp.float32)
        h2 = jnp.maximum(h2 * s2_ref[...] + t2_ref[...], 0.0)

        # Linear3 (class dim zero-padded to a lane-dense multiple of 128)
        out = jnp.dot(h2.astype(mm_dtype), w3_ref[...],
                      preferred_element_type=jnp.float32)
        o_ref[...] = (out + b3_ref[...]).astype(o_ref.dtype)


def image_classifier_head(x_nchw, params, *, batch_tile=None, hw_tile=None,
                          compute_dtype=jnp.bfloat16, eps=1e-5,
                          single_buffer_weights=True):
    """Fused Pallas TPU forward for ImageClassifierHead (eval mode).

    x_nchw: (N, F, H, W) features (F = in_features).
    params: dict with
        w1 (F,B), b1 (B,), g1/be1/m1/v1 (B,)  -- Linear1 + BatchNorm1
        w2 (B,B), b2 (B,), g2/be2/m2/v2 (B,)  -- Linear2 + BatchNorm2
        w3 (B,C), b3 (C,)                     -- final Linear
      NOTE: w* are (in, out), i.e. torch nn.Linear.weight TRANSPOSED.
    Returns (N, C) float32 logits.
    """
    N, F, H, W = x_nchw.shape
    HW = H * W
    B = params["w1"].shape[1]
    C = params["w3"].shape[1]
    Cp = _round_up(C, 128)

    # ---- Fold eval-mode BatchNorm + linear bias (+ pool 1/HW) into affines.
    def _fold(g, be, m, v, b):
        s = g.astype(jnp.float32) / jnp.sqrt(v.astype(jnp.float32) + eps)
        t = be.astype(jnp.float32) - m.astype(jnp.float32) * s \
            + b.astype(jnp.float32) * s
        return s, t

    s1, t1 = _fold(params["g1"], params["be1"], params["m1"], params["v1"],
                   params["b1"])
    s1 = s1 * (1.0 / HW)        # kernel pools with a raw SUM; scale lives here
    s2, t2 = _fold(params["g2"], params["be2"], params["m2"], params["v2"],
                   params["b2"])
    s1, t1, s2, t2 = (a.reshape(1, -1) for a in (s1, t1, s2, t2))

    w1 = params["w1"].astype(compute_dtype)
    w2 = params["w2"].astype(compute_dtype)
    w3 = jnp.zeros((B, Cp), compute_dtype).at[:, :C].set(
        params["w3"].astype(compute_dtype))
    b3 = jnp.zeros((1, Cp), jnp.float32).at[:, :C].set(
        params["b3"].astype(jnp.float32).reshape(1, -1))

    # ---- Per-generation VMEM budget -> tile sizes.
    xbytes = jnp.dtype(compute_dtype).itemsize
    vmem_phys = _vmem_capacity_bytes()
    vmem_limit_bytes = min(int(vmem_phys * 0.75), 100 * 1024 * 1024)
    tile_budget = vmem_limit_bytes - (8 << 20)          # compiler-scratch headroom

    # HW chunking: last block dim must be a multiple of 128 or the full extent.
    if hw_tile is None:
        hw_cap = 2048
        if HW % 128 == 0 and HW > hw_cap:
            hw_tile = 128
            d = 256
            while d <= hw_cap:
                if HW % d == 0:
                    hw_tile = d
                d += 128
        else:
            hw_tile = HW
    assert hw_tile == HW or (HW % hw_tile == 0 and hw_tile % 128 == 0)
    n_hw = HW // hw_tile

    lane_hw = _round_up(hw_tile, 128)
    F8 = _round_up(F, 8)
    # Resident weights (budget for double-buffering as the worst case) + per-row
    # pipelined activation bytes (x block double-buffered, output, pool scratch).
    weight_bytes = 2 * xbytes * (F8 * B + B * B + B * Cp) + 2 * 4 * (4 * B + Cp)
    per_row = 2 * F8 * lane_hw * xbytes + 2 * Cp * 4 + _round_up(F, 128) * 4
    avail = max(tile_budget - weight_bytes, 8 * per_row)
    tn_budget = min(512, max(8, (avail // per_row) // 8 * 8))

    if batch_tile is not None:
        tn = int(batch_tile)
    elif N <= 8:
        tn = N                  # full-extent batch block is always layout-legal
    else:
        tn = min(tn_budget, _round_up(N, 8))
        # keep >= 2 parallel grid steps so both v7x TensorCores stream rows
        tn = min(tn, max(8, (_round_up(N, 8) // 2) // 8 * 8))
    Np = _round_up(N, tn)

    # Pure reshape (row-major): pixels land on lanes, channels on sublanes.
    x = x_nchw.reshape(N, F, HW)
    # NOTE: a real backbone should already emit bf16 features; this cast only
    # exists so the self-contained demo can feed f32 inputs.
    x = x.astype(compute_dtype)
    if Np != N:
        x = jnp.pad(x, ((0, Np - N), (0, 0), (0, 0)))

    flops = 2 * Np * (F * B + B * B + B * Cp) + Np * F * HW
    bytes_accessed = (Np * F * HW * xbytes
                      + (F * B + B * B + B * Cp) * xbytes
                      + Np * Cp * 4)
    cost = pl.CostEstimate(flops=int(flops), transcendentals=0,
                           bytes_accessed=int(bytes_accessed))

    grid = (Np // tn, n_hw)

    def _make_call(weight_mode):
        def wfull(shape):
            if weight_mode is None:
                return pl.BlockSpec(shape, lambda i, j: (0, 0))
            return pl.BlockSpec(shape, lambda i, j: (0, 0),
                                pipeline_mode=weight_mode)

        return pl.pallas_call(
            _head_kernel,
            out_shape=jax.ShapeDtypeStruct((Np, Cp), jnp.float32),
            grid_spec=pltpu.PrefetchScalarGridSpec(
                num_scalar_prefetch=0,
                grid=grid,
                in_specs=[
                    pl.BlockSpec((tn, F, hw_tile), lambda i, j: (i, 0, j)),
                    wfull((F, B)), wfull((1, B)), wfull((1, B)),
                    wfull((B, B)), wfull((1, B)), wfull((1, B)),
                    wfull((B, Cp)), wfull((1, Cp)),
                ],
                out_specs=pl.BlockSpec((tn, Cp), lambda i, j: (i, 0)),
                scratch_shapes=[pltpu.VMEM((tn, F), jnp.float32)],
            ),
            compiler_params=pltpu.CompilerParams(
                dimension_semantics=("parallel", "arbitrary"),
                vmem_limit_bytes=vmem_limit_bytes,
            ),
            cost_estimate=cost,
        )

    args = (x, w1, s1, t1, w2, s2, t2, w3, b3)
    if single_buffer_weights and hasattr(pl, "Buffered"):
        try:
            out = _make_call(pl.Buffered(1))(*args)
        except Exception:
            # pipeline_mode not supported by this JAX version: fall back to the
            # default (double-buffered) invariant blocks.
            out = _make_call(None)(*args)
    else:
        out = _make_call(None)(*args)

    return out[:N, :C]


def _head_ref(x_nchw, params, eps=1e-5):
    """Pure-JAX f32 reference mirroring the PyTorch module in eval mode."""
    pooled = jnp.mean(x_nchw, axis=(2, 3))                       # pool + flatten
    h = pooled @ params["w1"] + params["b1"]
    h = (h - params["m1"]) / jnp.sqrt(params["v1"] + eps) * params["g1"] + params["be1"]
    h = jnp.maximum(h, 0.0)
    h = h @ params["w2"] + params["b2"]
    h = (h - params["m2"]) / jnp.sqrt(params["v2"] + eps) * params["g2"] + params["be2"]
    h = jnp.maximum(h, 0.0)
    return h @ params["w3"] + params["b3"]


if __name__ == "__main__":
    key = jax.random.PRNGKey(0)
    keys = jax.random.split(key, 16)

    # minibatch=2, in_features=32, spatial=16x16, bottleneck_dim=128, classes=4
    N, F, H, W = 2, 32, 16, 16
    B, C = 128, 4

    x = jax.random.normal(keys[0], (N, F, H, W), dtype=jnp.float32)
    params = dict(
        w1=jax.random.normal(keys[1], (F, B), dtype=jnp.float32) * 0.1,
        b1=jax.random.normal(keys[2], (B,), dtype=jnp.float32) * 0.1,
        g1=1.0 + 0.1 * jax.random.normal(keys[3], (B,), dtype=jnp.float32),
        be1=0.1 * jax.random.normal(keys[4], (B,), dtype=jnp.float32),
        m1=0.1 * jax.random.normal(keys[5], (B,), dtype=jnp.float32),
        v1=jax.random.uniform(keys[6], (B,), dtype=jnp.float32, minval=0.5, maxval=1.5),
        w2=jax.random.normal(keys[7], (B, B), dtype=jnp.float32) * 0.1,
        b2=jax.random.normal(keys[8], (B,), dtype=jnp.float32) * 0.1,
        g2=1.0 + 0.1 * jax.random.normal(keys[9], (B,), dtype=jnp.float32),
        be2=0.1 * jax.random.normal(keys[10], (B,), dtype=jnp.float32),
        m2=0.1 * jax.random.normal(keys[11], (B,), dtype=jnp.float32),
        v2=jax.random.uniform(keys[12], (B,), dtype=jnp.float32, minval=0.5, maxval=1.5),
        w3=jax.random.normal(keys[13], (B, C), dtype=jnp.float32) * 0.1,
        b3=jax.random.normal(keys[14], (C,), dtype=jnp.float32) * 0.1,
    )

    ref = _head_ref(x, params)

    # f32 compute path: tight check of the fused math (pool/BN/bias folding).
    out_f32 = jax.block_until_ready(
        image_classifier_head(x, params, compute_dtype=jnp.float32))
    assert out_f32.shape == (N, C), out_f32.shape
    assert jnp.allclose(out_f32, ref, rtol=1e-4, atol=1e-4), (out_f32, ref)

    # Default bf16 streaming path (production config): bf16-level tolerance.
    out_bf16 = jax.block_until_ready(image_classifier_head(x, params))
    assert out_bf16.shape == (N, C), out_bf16.shape
    assert jnp.allclose(out_bf16, ref, rtol=3e-2, atol=3e-2), (out_bf16, ref)

    print("KERNEL_OK")
</pallas_src>

<mosaic_0001>
module attributes {stable_mosaic.version = 11 : i64} {
  func.func @_head_kernel(%arg0: i32, %arg1: i32, %arg2: memref<2x32x256xf32, #tpu.memory_space<vmem>>, %arg3: memref<32x128xf32, #tpu.memory_space<vmem>>, %arg4: memref<1x128xf32, #tpu.memory_space<vmem>>, %arg5: memref<1x128xf32, #tpu.memory_space<vmem>>, %arg6: memref<128x128xf32, #tpu.memory_space<vmem>>, %arg7: memref<1x128xf32, #tpu.memory_space<vmem>>, %arg8: memref<1x128xf32, #tpu.memory_space<vmem>>, %arg9: memref<128x128xf32, #tpu.memory_space<vmem>>, %arg10: memref<1x128xf32, #tpu.memory_space<vmem>>, %arg11: memref<2x128xf32, #tpu.memory_space<vmem>>, %arg12: memref<2x32xf32, #tpu.memory_space<vmem>>) attributes {dimension_semantics = [#tpu.dimension_semantics<parallel>, #tpu.dimension_semantics<arbitrary>], iteration_bounds = array<i64: 1, 1>, scalar_prefetch = 0 : i64, scratch_operands = 1 : i64, tpu.core_type = #tpu.core_type<tc>, window_params = [{transform_indices = @transform_0, window_bounds = array<i64: 2, 32, 256>}, {pipeline_mode = #tpu.pipeline_mode<synchronous>, transform_indices = @transform_1, window_bounds = array<i64: 32, 128>}, {pipeline_mode = #tpu.pipeline_mode<synchronous>, transform_indices = @transform_2, window_bounds = array<i64: 1, 128>}, {pipeline_mode = #tpu.pipeline_mode<synchronous>, transform_indices = @transform_3, window_bounds = array<i64: 1, 128>}, {pipeline_mode = #tpu.pipeline_mode<synchronous>, transform_indices = @transform_4, window_bounds = array<i64: 128, 128>}, {pipeline_mode = #tpu.pipeline_mode<synchronous>, transform_indices = @transform_5, window_bounds = array<i64: 1, 128>}, {pipeline_mode = #tpu.pipeline_mode<synchronous>, transform_indices = @transform_6, window_bounds = array<i64: 1, 128>}, {pipeline_mode = #tpu.pipeline_mode<synchronous>, transform_indices = @transform_7, window_bounds = array<i64: 128, 128>}, {pipeline_mode = #tpu.pipeline_mode<synchronous>, transform_indices = @transform_8, window_bounds = array<i64: 1, 128>}, {transform_indices = @transform_9, window_bounds = array<i64: 2, 128>}]} {
    %c0_i32 = arith.constant 0 : i32
    %0 = arith.cmpi eq, %arg1, %c0_i32 : i32
    %1 = arith.extui %0 : i1 to i32
    %c0_i32_0 = arith.constant 0 : i32
    %2 = arith.cmpi ne, %1, %c0_i32_0 : i32
    scf.if %2 {
      %cst_9 = arith.constant 0.000000e+00 : f32
      %11 = vector.broadcast %cst_9 : f32 to vector<2x32xf32>
      %c0_10 = arith.constant 0 : index
      %c0_11 = arith.constant 0 : index
      %12 = vector.load %arg12[%c0_10, %c0_11] : memref<2x32xf32, #tpu.memory_space<vmem>>, vector<2x32xf32>
      tpu.vector_store %arg12[%c0_10, %c0_11], %11 {strides = array<i32>} : memref<2x32xf32, #tpu.memory_space<vmem>>, vector<2x32xf32>,
    } else {
    }
    %c0 = arith.constant 0 : index
    %c0_1 = arith.constant 0 : index
    %3 = vector.load %arg12[%c0, %c0_1] : memref<2x32xf32, #tpu.memory_space<vmem>>, vector<2x32xf32>
    %c0_2 = arith.constant 0 : index
    %c0_3 = arith.constant 0 : index
    %c0_4 = arith.constant 0 : index
    %4 = vector.load %arg2[%c0_2, %c0_3, %c0_4] : memref<2x32x256xf32, #tpu.memory_space<vmem>>, vector<2x32x256xf32>
    %cst = arith.constant dense<0.000000e+00> : vector<2x32xf32>
    %5 = vector.multi_reduction <add>, %4, %cst [2] : vector<2x32x256xf32> to vector<2x32xf32>
    %6 = arith.addf %3, %5 : vector<2x32xf32>
    %c0_5 = arith.constant 0 : index
    %c0_6 = arith.constant 0 : index
    %7 = vector.load %arg12[%c0_5, %c0_6] : memref<2x32xf32, #tpu.memory_space<vmem>>, vector<2x32xf32>
    tpu.vector_store %arg12[%c0_5, %c0_6], %6 {strides = array<i32>} : memref<2x32xf32, #tpu.memory_space<vmem>>, vector<2x32xf32>,
    %c0_i32_7 = arith.constant 0 : i32
    %8 = arith.cmpi eq, %arg1, %c0_i32_7 : i32
    %9 = arith.extui %8 : i1 to i32
    %c0_i32_8 = arith.constant 0 : i32
    %10 = arith.cmpi ne, %9, %c0_i32_8 : i32
    scf.if %10 {
      %c0_9 = arith.constant 0 : index
      %c0_10 = arith.constant 0 : index
      %11 = vector.load %arg12[%c0_9, %c0_10] : memref<2x32xf32, #tpu.memory_space<vmem>>, vector<2x32xf32>
      %c0_11 = arith.constant 0 : index
      %c0_12 = arith.constant 0 : index
      %12 = vector.load %arg3[%c0_11, %c0_12] : memref<32x128xf32, #tpu.memory_space<vmem>>, vector<32x128xf32>
      %cst_13 = arith.constant dense<0.000000e+00> : vector<2x128xf32>
      %13 = tpu.matmul %11, %12, %cst_13 {dimension_numbers = #tpu.dot_dimension_numbers<[1], [0], [0], [1], [0, 0, 1, 1], [], []>} : vector<2x32xf32>, vector<32x128xf32>, vector<2x128xf32> -> vector<2x128xf32>
      %c0_14 = arith.constant 0 : index
      %c0_15 = arith.constant 0 : index
      %14 = vector.load %arg4[%c0_14, %c0_15] : memref<1x128xf32, #tpu.memory_space<vmem>>, vector<1x128xf32>
      %15 = vector.broadcast %14 : vector<1x128xf32> to vector<2x128xf32>
      %16 = arith.mulf %13, %15 : vector<2x128xf32>
      %c0_16 = arith.constant 0 : index
      %c0_17 = arith.constant 0 : index
      %17 = vector.load %arg5[%c0_16, %c0_17] : memref<1x128xf32, #tpu.memory_space<vmem>>, vector<1x128xf32>
      %18 = vector.broadcast %17 : vector<1x128xf32> to vector<2x128xf32>
      %19 = arith.addf %16, %18 : vector<2x128xf32>
      %cst_18 = arith.constant 0.000000e+00 : f32
      %20 = vector.broadcast %cst_18 : f32 to vector<2x128xf32>
      %21 = arith.maximumf %19, %20 : vector<2x128xf32>
      %c0_19 = arith.constant 0 : index
      %c0_20 = arith.constant 0 : index
      %22 = vector.load %arg6[%c0_19, %c0_20] : memref<128x128xf32, #tpu.memory_space<vmem>>, vector<128x128xf32>
      %cst_21 = arith.constant dense<0.000000e+00> : vector<2x128xf32>
      %23 = tpu.matmul %21, %22, %cst_21 {dimension_numbers = #tpu.dot_dimension_numbers<[1], [0], [0], [1], [0, 0, 1, 1], [], []>} : vector<2x128xf32>, vector<128x128xf32>, vector<2x128xf32> -> vector<2x128xf32>
      %c0_22 = arith.constant 0 : index
      %c0_23 = arith.constant 0 : index
      %24 = vector.load %arg7[%c0_22, %c0_23] : memref<1x128xf32, #tpu.memory_space<vmem>>, vector<1x128xf32>
      %25 = vector.broadcast %24 : vector<1x128xf32> to vector<2x128xf32>
      %26 = arith.mulf %23, %25 : vector<2x128xf32>
      %c0_24 = arith.constant 0 : index
      %c0_25 = arith.constant 0 : index
      %27 = vector.load %arg8[%c0_24, %c0_25] : memref<1x128xf32, #tpu.memory_space<vmem>>, vector<1x128xf32>
      %28 = vector.broadcast %27 : vector<1x128xf32> to vector<2x128xf32>
      %29 = arith.addf %26, %28 : vector<2x128xf32>
      %cst_26 = arith.constant 0.000000e+00 : f32
      %30 = vector.broadcast %cst_26 : f32 to vector<2x128xf32>
      %31 = arith.maximumf %29, %30 : vector<2x128xf32>
      %c0_27 = arith.constant 0 : index
      %c0_28 = arith.constant 0 : index
      %32 = vector.load %arg9[%c0_27, %c0_28] : memref<128x128xf32, #tpu.memory_space<vmem>>, vector<128x128xf32>
      %cst_29 = arith.constant dense<0.000000e+00> : vector<2x128xf32>
      %33 = tpu.matmul %31, %32, %cst_29 {dimension_numbers = #tpu.dot_dimension_numbers<[1], [0], [0], [1], [0, 0, 1, 1], [], []>} : vector<2x128xf32>, vector<128x128xf32>, vector<2x128xf32> -> vector<2x128xf32>
      %c0_30 = arith.constant 0 : index
      %c0_31 = arith.constant 0 : index
      %34 = vector.load %arg10[%c0_30, %c0_31] : memref<1x128xf32, #tpu.memory_space<vmem>>, vector<1x128xf32>
      %35 = vector.broadcast %34 : vector<1x128xf32> to vector<2x128xf32>
      %36 = arith.addf %33, %35 : vector<2x128xf32>
      %c0_32 = arith.constant 0 : index
      %c0_33 = arith.constant 0 : index
      %37 = vector.load %arg11[%c0_32, %c0_33] : memref<2x128xf32, #tpu.memory_space<vmem>>, vector<2x128xf32>
      tpu.vector_store %arg11[%c0_32, %c0_33], %36 {strides = array<i32>} : memref<2x128xf32, #tpu.memory_space<vmem>>, vector<2x128xf32>,
    } else {
    }
    return
  }
  func.func @transform_0(%arg0: i32, %arg1: i32) -> (i32, i32, i32) {
    %c0_i32 = arith.constant 0 : i32
    %c0_i32_0 = arith.constant 0 : i32
    return %arg0, %c0_i32, %arg1 : i32, i32, i32
  }
  func.func @transform_1(%arg0: i32, %arg1: i32) -> (i32, i32) {
    %c0_i32 = arith.constant 0 : i32
    %c0_i32_0 = arith.constant 0 : i32
    %c0_i32_1 = arith.constant 0 : i32
    return %c0_i32, %c0_i32_0 : i32, i32
  }
  func.func @transform_2(%arg0: i32, %arg1: i32) -> (i32, i32) {
    %c0_i32 = arith.constant 0 : i32
    %c0_i32_0 = arith.constant 0 : i32
    %c0_i32_1 = arith.constant 0 : i32
    return %c0_i32, %c0_i32_0 : i32, i32
  }
  func.func @transform_3(%arg0: i32, %arg1: i32) -> (i32, i32) {
    %c0_i32 = arith.constant 0 : i32
    %c0_i32_0 = arith.constant 0 : i32
    %c0_i32_1 = arith.constant 0 : i32
    return %c0_i32, %c0_i32_0 : i32, i32
  }
  func.func @transform_4(%arg0: i32, %arg1: i32) -> (i32, i32) {
    %c0_i32 = arith.constant 0 : i32
    %c0_i32_0 = arith.constant 0 : i32
    %c0_i32_1 = arith.constant 0 : i32
    return %c0_i32, %c0_i32_0 : i32, i32
  }
  func.func @transform_5(%arg0: i32, %arg1: i32) -> (i32, i32) {
    %c0_i32 = arith.constant 0 : i32
    %c0_i32_0 = arith.constant 0 : i32
    %c0_i32_1 = arith.constant 0 : i32
    return %c0_i32, %c0_i32_0 : i32, i32
  }
  func.func @transform_6(%arg0: i32, %arg1: i32) -> (i32, i32) {
    %c0_i32 = arith.constant 0 : i32
    %c0_i32_0 = arith.constant 0 : i32
    %c0_i32_1 = arith.constant 0 : i32
    return %c0_i32, %c0_i32_0 : i32, i32
  }
  func.func @transform_7(%arg0: i32, %arg1: i32) -> (i32, i32) {
    %c0_i32 = arith.constant 0 : i32
    %c0_i32_0 = arith.constant 0 : i32
    %c0_i32_1 = arith.constant 0 : i32
    return %c0_i32, %c0_i32_0 : i32, i32
  }
  func.func @transform_8(%arg0: i32, %arg1: i32) -> (i32, i32) {
    %c0_i32 = arith.constant 0 : i32
    %c0_i32_0 = arith.constant 0 : i32
    %c0_i32_1 = arith.constant 0 : i32
    return %c0_i32, %c0_i32_0 : i32, i32
  }
  func.func @transform_9(%arg0: i32, %arg1: i32) -> (i32, i32) {
    %c0_i32 = arith.constant 0 : i32
    %c0_i32_0 = arith.constant 0 : i32
    return %arg0, %c0_i32 : i32, i32
  }
}

module attributes {stable_mosaic.version = 11 : i64} {
  func.func @_head_kernel(%arg0: i32, %arg1: i32, %arg2: memref<2x32x256xf32, #tpu.memory_space<vmem>>, %arg3: memref<32x128xf32, #tpu.memory_space<vmem>>, %arg4: memref<1x128xf32, #tpu.memory_space<vmem>>, %arg5: memref<1x128xf32, #tpu.memory_space<vmem>>, %arg6: memref<128x128xf32, #tpu.memory_space<vmem>>, %arg7: memref<1x128xf32, #tpu.memory_space<vmem>>, %arg8: memref<1x128xf32, #tpu.memory_space<vmem>>, %arg9: memref<128x128xf32, #tpu.memory_space<vmem>>, %arg10: memref<1x128xf32, #tpu.memory_space<vmem>>, %arg11: memref<2x128xf32, #tpu.memory_space<vmem>>, %arg12: memref<2x32xf32, #tpu.memory_space<vmem>>) attributes {dimension_semantics = [#tpu.dimension_semantics<parallel>, #tpu.dimension_semantics<arbitrary>], iteration_bounds = array<i64: 1, 1>, scalar_prefetch = 0 : i64, scratch_operands = 1 : i64, tpu.core_type = #tpu.core_type<tc>, window_params = [{transform_indices = @transform_0, window_bounds = array<i64: 2, 32, 256>}, {pipeline_mode = #tpu.pipeline_mode<synchronous>, transform_indices = @transform_1, window_bounds = array<i64: 32, 128>}, {pipeline_mode = #tpu.pipeline_mode<synchronous>, transform_indices = @transform_2, window_bounds = array<i64: 1, 128>}, {pipeline_mode = #tpu.pipeline_mode<synchronous>, transform_indices = @transform_3, window_bounds = array<i64: 1, 128>}, {pipeline_mode = #tpu.pipeline_mode<synchronous>, transform_indices = @transform_4, window_bounds = array<i64: 128, 128>}, {pipeline_mode = #tpu.pipeline_mode<synchronous>, transform_indices = @transform_5, window_bounds = array<i64: 1, 128>}, {pipeline_mode = #tpu.pipeline_mode<synchronous>, transform_indices = @transform_6, window_bounds = array<i64: 1, 128>}, {pipeline_mode = #tpu.pipeline_mode<synchronous>, transform_indices = @transform_7, window_bounds = array<i64: 128, 128>}, {pipeline_mode = #tpu.pipeline_mode<synchronous>, transform_indices = @transform_8, window_bounds = array<i64: 1, 128>}, {transform_indices = @transform_9, window_bounds = array<i64: 2, 128>}]} {
    %c0_i32 = arith.constant 0 : i32
    %0 = arith.cmpi eq, %arg1, %c0_i32 : i32
    %1 = arith.extui %0 : i1 to i32
    %c0_i32_0 = arith.constant 0 : i32
    %2 = arith.cmpi ne, %1, %c0_i32_0 : i32
    scf.if %2 {
      %cst_9 = arith.constant 0.000000e+00 : f32
      %11 = vector.broadcast %cst_9 : f32 to vector<2x32xf32>
      %c0_10 = arith.constant 0 : index
      %c0_11 = arith.constant 0 : index
      %12 = vector.load %arg12[%c0_10, %c0_11] : memref<2x32xf32, #tpu.memory_space<vmem>>, vector<2x32xf32>
      tpu.vector_store %arg12[%c0_10, %c0_11], %11 {strides = array<i32>} : memref<2x32xf32, #tpu.memory_space<vmem>>, vector<2x32xf32>,
    } else {
    }
    %c0 = arith.constant 0 : index
    %c0_1 = arith.constant 0 : index
    %3 = vector.load %arg12[%c0, %c0_1] : memref<2x32xf32, #tpu.memory_space<vmem>>, vector<2x32xf32>
    %c0_2 = arith.constant 0 : index
    %c0_3 = arith.constant 0 : index
    %c0_4 = arith.constant 0 : index
    %4 = vector.load %arg2[%c0_2, %c0_3, %c0_4] : memref<2x32x256xf32, #tpu.memory_space<vmem>>, vector<2x32x256xf32>
    %cst = arith.constant dense<0.000000e+00> : vector<2x32xf32>
    %5 = vector.multi_reduction <add>, %4, %cst [2] : vector<2x32x256xf32> to vector<2x32xf32>
    %6 = arith.addf %3, %5 : vector<2x32xf32>
    %c0_5 = arith.constant 0 : index
    %c0_6 = arith.constant 0 : index
    %7 = vector.load %arg12[%c0_5, %c0_6] : memref<2x32xf32, #tpu.memory_space<vmem>>, vector<2x32xf32>
    tpu.vector_store %arg12[%c0_5, %c0_6], %6 {strides = array<i32>} : memref<2x32xf32, #tpu.memory_space<vmem>>, vector<2x32xf32>,
    %c0_i32_7 = arith.constant 0 : i32
    %8 = arith.cmpi eq, %arg1, %c0_i32_7 : i32
    %9 = arith.extui %8 : i1 to i32
    %c0_i32_8 = arith.constant 0 : i32
    %10 = arith.cmpi ne, %9, %c0_i32_8 : i32
    scf.if %10 {
      %c0_9 = arith.constant 0 : index
      %c0_10 = arith.constant 0 : index
      %11 = vector.load %arg12[%c0_9, %c0_10] : memref<2x32xf32, #tpu.memory_space<vmem>>, vector<2x32xf32>
      %c0_11 = arith.constant 0 : index
      %c0_12 = arith.constant 0 : index
      %12 = vector.load %arg3[%c0_11, %c0_12] : memref<32x128xf32, #tpu.memory_space<vmem>>, vector<32x128xf32>
      %cst_13 = arith.constant dense<0.000000e+00> : vector<2x128xf32>
      %13 = tpu.matmul %11, %12, %cst_13 {dimension_numbers = #tpu.dot_dimension_numbers<[1], [0], [0], [1], [0, 0, 1, 1], [], []>} : vector<2x32xf32>, vector<32x128xf32>, vector<2x128xf32> -> vector<2x128xf32>
      %c0_14 = arith.constant 0 : index
      %c0_15 = arith.constant 0 : index
      %14 = vector.load %arg4[%c0_14, %c0_15] : memref<1x128xf32, #tpu.memory_space<vmem>>, vector<1x128xf32>
      %15 = vector.broadcast %14 : vector<1x128xf32> to vector<2x128xf32>
      %16 = arith.mulf %13, %15 : vector<2x128xf32>
      %c0_16 = arith.constant 0 : index
      %c0_17 = arith.constant 0 : index
      %17 = vector.load %arg5[%c0_16, %c0_17] : memref<1x128xf32, #tpu.memory_space<vmem>>, vector<1x128xf32>
      %18 = vector.broadcast %17 : vector<1x128xf32> to vector<2x128xf32>
      %19 = arith.addf %16, %18 : vector<2x128xf32>
      %cst_18 = arith.constant 0.000000e+00 : f32
      %20 = vector.broadcast %cst_18 : f32 to vector<2x128xf32>
      %21 = arith.maximumf %19, %20 : vector<2x128xf32>
      %c0_19 = arith.constant 0 : index
      %c0_20 = arith.constant 0 : index
      %22 = vector.load %arg6[%c0_19, %c0_20] : memref<128x128xf32, #tpu.memory_space<vmem>>, vector<128x128xf32>
      %cst_21 = arith.constant dense<0.000000e+00> : vector<2x128xf32>
      %23 = tpu.matmul %21, %22, %cst_21 {dimension_numbers = #tpu.dot_dimension_numbers<[1], [0], [0], [1], [0, 0, 1, 1], [], []>} : vector<2x128xf32>, vector<128x128xf32>, vector<2x128xf32> -> vector<2x128xf32>
      %c0_22 = arith.constant 0 : index
      %c0_23 = arith.constant 0 : index
      %24 = vector.load %arg7[%c0_22, %c0_23] : memref<1x128xf32, #tpu.memory_space<vmem>>, vector<1x128xf32>
      %25 = vector.broadcast %24 : vector<1x128xf32> to vector<2x128xf32>
      %26 = arith.mulf %23, %25 : vector<2x128xf32>
      %c0_24 = arith.constant 0 : index
      %c0_25 = arith.constant 0 : index
      %27 = vector.load %arg8[%c0_24, %c0_25] : memref<1x128xf32, #tpu.memory_space<vmem>>, vector<1x128xf32>
      %28 = vector.broadcast %27 : vector<1x128xf32> to vector<2x128xf32>
      %29 = arith.addf %26, %28 : vector<2x128xf32>
      %cst_26 = arith.constant 0.000000e+00 : f32
      %30 = vector.broadcast %cst_26 : f32 to vector<2x128xf32>
      %31 = arith.maximumf %29, %30 : vector<2x128xf32>
      %c0_27 = arith.constant 0 : index
      %c0_28 = arith.constant 0 : index
      %32 = vector.load %arg9[%c0_27, %c0_28] : memref<128x128xf32, #tpu.memory_space<vmem>>, vector<128x128xf32>
      %cst_29 = arith.constant dense<0.000000e+00> : vector<2x128xf32>
      %33 = tpu.matmul %31, %32, %cst_29 {dimension_numbers = #tpu.dot_dimension_numbers<[1], [0], [0], [1], [0, 0, 1, 1], [], []>} : vector<2x128xf32>, vector<128x128xf32>, vector<2x128xf32> -> vector<2x128xf32>
      %c0_30 = arith.constant 0 : index
      %c0_31 = arith.constant 0 : index
      %34 = vector.load %arg10[%c0_30, %c0_31] : memref<1x128xf32, #tpu.memory_space<vmem>>, vector<1x128xf32>
      %35 = vector.broadcast %34 : vector<1x128xf32> to vector<2x128xf32>
      %36 = arith.addf %33, %35 : vector<2x128xf32>
      %c0_32 = arith.constant 0 : index
      %c0_33 = arith.constant 0 : index
      %37 = vector.load %arg11[%c0_32, %c0_33] : memref<2x128xf32, #tpu.memory_space<vmem>>, vector<2x128xf32>
      tpu.vector_store %arg11[%c0_32, %c0_33], %36 {strides = array<i32>} : memref<2x128xf32, #tpu.memory_space<vmem>>, vector<2x128xf32>,
    } else {
    }
    return
  }
  func.func @transform_0(%arg0: i32, %arg1: i32) -> (i32, i32, i32) {
    %c0_i32 = arith.constant 0 : i32
    %c0_i32_0 = arith.constant 0 : i32
    return %arg0, %c0_i32, %arg1 : i32, i32, i32
  }
  func.func @transform_1(%arg0: i32, %arg1: i32) -> (i32, i32) {
    %c0_i32 = arith.constant 0 : i32
    %c0_i32_0 = arith.constant 0 : i32
    %c0_i32_1 = arith.constant 0 : i32
    return %c0_i32, %c0_i32_0 : i32, i32
  }
  func.func @transform_2(%arg0: i32, %arg1: i32) -> (i32, i32) {
    %c0_i32 = arith.constant 0 : i32
    %c0_i32_0 = arith.constant 0 : i32
    %c0_i32_1 = arith.constant 0 : i32
    return %c0_i32, %c0_i32_0 : i32, i32
  }
  func.func @transform_3(%arg0: i32, %arg1: i32) -> (i32, i32) {
    %c0_i32 = arith.constant 0 : i32
    %c0_i32_0 = arith.constant 0 : i32
    %c0_i32_1 = arith.constant 0 : i32
    return %c0_i32, %c0_i32_0 : i32, i32
  }
  func.func @transform_4(%arg0: i32, %arg1: i32) -> (i32, i32) {
    %c0_i32 = arith.constant 0 : i32
    %c0_i32_0 = arith.constant 0 : i32
    %c0_i32_1 = arith.constant 0 : i32
    return %c0_i32, %c0_i32_0 : i32, i32
  }
  func.func @transform_5(%arg0: i32, %arg1: i32) -> (i32, i32) {
    %c0_i32 = arith.constant 0 : i32
    %c0_i32_0 = arith.constant 0 : i32
    %c0_i32_1 = arith.constant 0 : i32
    return %c0_i32, %c0_i32_0 : i32, i32
  }
  func.func @transform_6(%arg0: i32, %arg1: i32) -> (i32, i32) {
    %c0_i32 = arith.constant 0 : i32
    %c0_i32_0 = arith.constant 0 : i32
    %c0_i32_1 = arith.constant 0 : i32
    return %c0_i32, %c0_i32_0 : i32, i32
  }
  func.func @transform_7(%arg0: i32, %arg1: i32) -> (i32, i32) {
    %c0_i32 = arith.constant 0 : i32
    %c0_i32_0 = arith.constant 0 : i32
    %c0_i32_1 = arith.constant 0 : i32
    return %c0_i32, %c0_i32_0 : i32, i32
  }
  func.func @transform_8(%arg0: i32, %arg1: i32) -> (i32, i32) {
    %c0_i32 = arith.constant 0 : i32
    %c0_i32_0 = arith.constant 0 : i32
    %c0_i32_1 = arith.constant 0 : i32
    return %c0_i32, %c0_i32_0 : i32, i32
  }
  func.func @transform_9(%arg0: i32, %arg1: i32) -> (i32, i32) {
    %c0_i32 = arith.constant 0 : i32
    %c0_i32_0 = arith.constant 0 : i32
    return %arg0, %c0_i32 : i32, i32
  }
}

</mosaic_0001>

<llo_original>
// kernel: tpu_custom_call.1
$region0: #{tpu_custom_call.1}
  #allocation0 [shape = 'u32[]', space=smem, size = 0x4, offset = 0x4, fixed_abs, tag = 'smem constant byte address 0x4 - core index']
  #allocation1 [shape = 'u32[144,128]{1,0:T(1,128)}', space=vmem, size = 0x12000, scoped, tag = 'internal scratch']
  #allocation2 [shape = 'f32[2,32]{1,0:T(2,128)}', space=vmem, size = 0x400, scoped, tag = 'scratch operand']
  %s0 = inlined_call_operand.hbm [shape: f32[2,32,256], index: 0, kind: input, shape index: {}]
  %s1 = inlined_call_operand.hbm [shape: f32[32,128], index: 1, kind: input, shape index: {}]
  %s2 = inlined_call_operand.vmem [shape: f32[1,128], index: 2, kind: input, shape index: {}]
  %s3 = inlined_call_operand.vmem [shape: f32[1,128], index: 3, kind: input, shape index: {}]
  %s4 = inlined_call_operand.hbm [shape: f32[128,128], index: 4, kind: input, shape index: {}]
  %s5 = inlined_call_operand.vmem [shape: f32[1,128], index: 5, kind: input, shape index: {}]
  %s6 = inlined_call_operand.vmem [shape: f32[1,128], index: 6, kind: input, shape index: {}]
  %s7 = inlined_call_operand.hbm [shape: f32[128,128], index: 7, kind: input, shape index: {}]
  %s8 = inlined_call_operand.vmem [shape: f32[1,128], index: 8, kind: input, shape index: {}]
  %s9 = inlined_call_operand.hbm [shape: f32[2,128], index: 9, kind: output, shape index: {}]
  %s10 = sld [smem:[#allocation0]]
  $region70: #{tpu_custom_call.1} parent=0
    _
  %s12 = ssub.s32 1, %s10
  %s13 = scalar_select 0, %s12, %s10
  $region1: #{tpu_custom_call.1} parent=0
    #allocation3 [shape = 'u8[65536]{0}', space=vmem, size = 0x10000, scoped, tag = 'input window, operand 0, single buffered']
    #allocation4 [shape = 's32[1]{0}', space=sflag, size = 0x4, scoped, tag = 'scoped memory for tpu_custom_call.1']
    #allocation5 [shape = 's32[1]{0}', space=sflag, size = 0x4, scoped, tag = 'scoped memory for tpu_custom_call.1']
    #allocation6 [shape = 'u8[16384]{0}', space=vmem, size = 0x4000, scoped, tag = 'input window, operand 1, single buffered']
    #allocation7 [shape = 's32[1]{0}', space=sflag, size = 0x4, scoped, tag = 'scoped memory for tpu_custom_call.1']
    #allocation8 [shape = 'u8[65536]{0}', space=vmem, size = 0x10000, scoped, tag = 'input window, operand 4, single buffered']
    #allocation9 [shape = 'u8[65536]{0}', space=vmem, size = 0x10000, scoped, tag = 'input window, operand 7, single buffered']
    #allocation10 [shape = 's32[1]{0}', space=sflag, size = 0x4, scoped, tag = 'scoped memory for tpu_custom_call.1']
    #allocation11 [shape = 'u8[1024]{0}', space=vmem, size = 0x400, scoped, tag = 'output window, operand 0, single buffered']
    %14 = vsyncpa [#allocation4], 0
    %15 = vsyncpa [#allocation7], 0
    %16 = vsyncpa [#allocation10], 0
    %17 = vsyncpa [#allocation5], 0
    // Predicated region
    $region2: #{tpu_custom_call.1} parent=1 // pred_check
      _
    $region3: #{tpu_custom_call.1} parent=1 // pred_check_branch
      %19 = sbr.rel (0) target = $region5
    $region4: #{tpu_custom_call.1} parent=1 // pred_region
      %s21 = ssub.s32 2048, 2048
      %22 = vsyncadd [#allocation4], %s21
      %s23 = sshll.u32 [#allocation3], 4
      %s24 = int_to_ptr.vmem [resolvable:$true] %s23
      %29 = dma.hbm_to_vmem [thread:$0]  %s0, 2048, %s24, [#allocation4], 256, 256, 16
    $region5: #{tpu_custom_call.1} parent=1 // pred_fallthru
      _
    // Predicated region
    $region6: #{tpu_custom_call.1} parent=1 // pred_check
      _
    $region7: #{tpu_custom_call.1} parent=1 // pred_check_branch
      %31 = sbr.rel (0) target = $region9
    $region8: #{tpu_custom_call.1} parent=1 // pred_region
      %s33 = ssub.s32 512, 512
      %34 = vsyncadd [#allocation7], %s33
      %s35 = sshll.u32 [#allocation6], 4
      %s36 = int_to_ptr.vmem [resolvable:$true] %s35
      %41 = dma.hbm_to_vmem [thread:$0]  %s1, 512, %s36, [#allocation7], 128, 128, 8
    $region9: #{tpu_custom_call.1} parent=1 // pred_fallthru
      _
    // Predicated region
    $region10: #{tpu_custom_call.1} parent=1 // pred_check
      _
    $region11: #{tpu_custom_call.1} parent=1 // pred_check_branch
      %43 = sbr.rel (0) target = $region13
    $region12: #{tpu_custom_call.1} parent=1 // pred_region
      _
    $region13: #{tpu_custom_call.1} parent=1 // pred_fallthru
      _
    // Predicated region
    $region14: #{tpu_custom_call.1} parent=1 // pred_check
      _
    $region15: #{tpu_custom_call.1} parent=1 // pred_check_branch
      %45 = sbr.rel (0) target = $region17
    $region16: #{tpu_custom_call.1} parent=1 // pred_region
      _
    $region17: #{tpu_custom_call.1} parent=1 // pred_fallthru
      _
    // Predicated region
    $region18: #{tpu_custom_call.1} parent=1 // pred_check
      _
    $region19: #{tpu_custom_call.1} parent=1 // pred_check_branch
      %47 = sbr.rel (0) target = $region21
    $region20: #{tpu_custom_call.1} parent=1 // pred_region
      %s49 = ssub.s32 2048, 2048
      %50 = vsyncadd [#allocation7], %s49
      %s51 = sshll.u32 [#allocation8], 4
      %s52 = int_to_ptr.vmem [resolvable:$true] %s51
      %57 = dma.hbm_to_vmem [thread:$0]  %s4, 2048, %s52, [#allocation7], 128, 128, 8
    $region21: #{tpu_custom_call.1} parent=1 // pred_fallthru
      _
    // Predicated region
    $region22: #{tpu_custom_call.1} parent=1 // pred_check
      _
    $region23: #{tpu_custom_call.1} parent=1 // pred_check_branch
      %59 = sbr.rel (0) target = $region25
    $region24: #{tpu_custom_call.1} parent=1 // pred_region
      _
    $region25: #{tpu_custom_call.1} parent=1 // pred_fallthru
      _
    // Predicated region
    $region26: #{tpu_custom_call.1} parent=1 // pred_check
      _
    $region27: #{tpu_custom_call.1} parent=1 // pred_check_branch
      %61 = sbr.rel (0) target = $region29
    $region28: #{tpu_custom_call.1} parent=1 // pred_region
      _
    $region29: #{tpu_custom_call.1} parent=1 // pred_fallthru
      _
    // Predicated region
    $region30: #{tpu_custom_call.1} parent=1 // pred_check
      _
    $region31: #{tpu_custom_call.1} parent=1 // pred_check_branch
      %63 = sbr.rel (0) target = $region33
    $region32: #{tpu_custom_call.1} parent=1 // pred_region
      %s65 = ssub.s32 2048, 2048
      %66 = vsyncadd [#allocation10], %s65
      %s67 = sshll.u32 [#allocation9], 4
      %s68 = int_to_ptr.vmem [resolvable:$true] %s67
      %73 = dma.hbm_to_vmem [thread:$0]  %s7, 2048, %s68, [#allocation10], 128, 128, 8
    $region33: #{tpu_custom_call.1} parent=1 // pred_fallthru
      _
    // Predicated region
    $region34: #{tpu_custom_call.1} parent=1 // pred_check
      _
    $region35: #{tpu_custom_call.1} parent=1 // pred_check_branch
      %75 = sbr.rel (0) target = $region37
    $region36: #{tpu_custom_call.1} parent=1 // pred_region
      _
    $region37: #{tpu_custom_call.1} parent=1 // pred_fallthru
      _
    // Predicated region
    $region38: #{tpu_custom_call.1} parent=1 // pred_check
      _
    $region39: #{tpu_custom_call.1} parent=1 // pred_check_branch
      %77 = sbr.rel (0) target = $region41
    $region40: #{tpu_custom_call.1} parent=1 // pred_region
      %78 = dma.done [#allocation4], 2048
    $region41: #{tpu_custom_call.1} parent=1 // pred_fallthru
      _
    // Predicated region
    $region42: #{tpu_custom_call.1} parent=1 // pred_check
      _
    $region43: #{tpu_custom_call.1} parent=1 // pred_check_branch
      %80 = sbr.rel (0) target = $region45
    $region44: #{tpu_custom_call.1} parent=1 // pred_region
      %81 = dma.done [#allocation7], 512
    $region45: #{tpu_custom_call.1} parent=1 // pred_fallthru
      _
    // Predicated region
    $region46: #{tpu_custom_call.1} parent=1 // pred_check
      _
    $region47: #{tpu_custom_call.1} parent=1 // pred_check_branch
      %83 = sbr.rel (0) target = $region49
    $region48: #{tpu_custom_call.1} parent=1 // pred_region
      %84 = dma.done [#allocation7], 2048
    $region49: #{tpu_custom_call.1} parent=1 // pred_fallthru
      _
    // Predicated region
    $region50: #{tpu_custom_call.1} parent=1 // pred_check
      _
    $region51: #{tpu_custom_call.1} parent=1 // pred_check_branch
      %86 = sbr.rel (0) target = $region53
    $region52: #{tpu_custom_call.1} parent=1 // pred_region
      %87 = dma.done [#allocation10], 2048
    $region53: #{tpu_custom_call.1} parent=1 // pred_fallthru
      _
    %p88 = scmp.eq.s32.totalorder 0, 0
    // Predicated region
    $region54: #{tpu_custom_call.1} parent=1 // pred_check
      %p89 = pneg %p88
    $region55: #{tpu_custom_call.1} parent=1 // pred_check_branch
      %91 = sbr.rel (%p89) target = $region57
    $region56: #{tpu_custom_call.1} parent=1 // pred_region
      %vm92 = vcmask 254976
      %93 = vst.msk [vmem:[#allocation2] sm:$0x3] %vm92, 0.0
    $region57: #{tpu_custom_call.1} parent=1 // pred_fallthru
      _
    %v94 = vld [vmem:[#allocation2] sm:$0x3]
    %v95 = vld [vmem:[#allocation3] sm:$0xff]
    %v96 = vld [vmem:[#allocation3 + $0x8] sm:$0xff]
    %v97 = vld [vmem:[#allocation3 + $0x10] sm:$0xff]
    %v98 = vld [vmem:[#allocation3 + $0x18] sm:$0xff]
    %v99 = vld [vmem:[#allocation3 + $0x20] sm:$0xff]
    %v100 = vld [vmem:[#allocation3 + $0x28] sm:$0xff]
    %v101 = vld [vmem:[#allocation3 + $0x30] sm:$0xff]
    %v102 = vld [vmem:[#allocation3 + $0x38] sm:$0xff]
    %v103 = vld [vmem:[#allocation3 + $0x40] sm:$0xff]
    %v104 = vld [vmem:[#allocation3 + $0x48] sm:$0xff]
    %v105 = vld [vmem:[#allocation3 + $0x50] sm:$0xff]
    %v106 = vld [vmem:[#allocation3 + $0x58] sm:$0xff]
    %v107 = vld [vmem:[#allocation3 + $0x60] sm:$0xff]
    %v108 = vld [vmem:[#allocation3 + $0x68] sm:$0xff]
    %v109 = vld [vmem:[#allocation3 + $0x70] sm:$0xff]
    %v110 = vld [vmem:[#allocation3 + $0x78] sm:$0xff]
    %v111 = vadd.f32 %v95, %v96
    %112 = vadd.xlane.f32.xlu0 %v111
    %v113 = vpop.xlane.xlu0 %112
    %v114 = vadd.f32 %v97, %v98
    %115 = vadd.xlane.f32.xlu0 %v114
    %v116 = vpop.xlane.xlu0 %115
    %v117 = vadd.f32 %v99, %v100
    %118 = vadd.xlane.f32.xlu0 %v117
    %v119 = vpop.xlane.xlu0 %118
    %v120 = vadd.f32 %v101, %v102
    %121 = vadd.xlane.f32.xlu0 %v120
    %v122 = vpop.xlane.xlu0 %121
    %v123 = vadd.f32 %v103, %v104
    %124 = vadd.xlane.f32.xlu0 %v123
    %v125 = vpop.xlane.xlu0 %124
    %v126 = vadd.f32 %v105, %v106
    %127 = vadd.xlane.f32.xlu0 %v126
    %v128 = vpop.xlane.xlu0 %127
    %v129 = vadd.f32 %v107, %v108
    %130 = vadd.xlane.f32.xlu0 %v129
    %v131 = vpop.xlane.xlu0 %130
    %v132 = vadd.f32 %v109, %v110
    %133 = vadd.xlane.f32.xlu0 %v132
    %v134 = vpop.xlane.xlu0 %133
    %v143 = vlaneseq
    %v144 = vand.u32 %v143, 127
    %v145 = vlaneseq
    %v146 = vshrl.u32 %v145, 7
    %v147 = vsub.s32 %v144, %v146
    %v148 = vrot.slane %v113, %v147
    %v149 = vadd.s32 %v144, 4294967288
    %v150 = vlaneseq
    %v151 = vshrl.u32 %v150, 7
    %v152 = vsub.s32 %v149, %v151
    %v153 = vrot.slane %v116, %v152
    %vm154 = vcmask 130112
    %v155 = vsel %vm154, %v153, %v148
    %v156 = vadd.s32 %v144, 4294967280
    %v157 = vlaneseq
    %v158 = vshrl.u32 %v157, 7
    %v159 = vsub.s32 %v156, %v158
    %v160 = vrot.slane %v119, %v159
    %vm161 = vcmask 195712
    %v162 = vsel %vm161, %v160, %v155
    %v163 = vadd.s32 %v144, 4294967272
    %v164 = vlaneseq
    %v165 = vshrl.u32 %v164, 7
    %v166 = vsub.s32 %v163, %v165
    %v167 = vrot.slane %v122, %v166
    %vm168 = vcmask 261312
    %v169 = vsel %vm168, %v167, %v162
    %v170 = vlaneseq
    %v171 = vshrl.u32 %v170, 7
    %v172 = vsub.s32 %v144, %v171
    %v173 = vrot.slane %v125, %v172
    %v174 = vlaneseq
    %v175 = vshrl.u32 %v174, 7
    %v176 = vsub.s32 %v149, %v175
    %v177 = vrot.slane %v128, %v176
    %v178 = vsel %vm154, %v177, %v173
    %v179 = vlaneseq
    %v180 = vshrl.u32 %v179, 7
    %v181 = vsub.s32 %v156, %v180
    %v182 = vrot.slane %v131, %v181
    %v183 = vsel %vm161, %v182, %v178
    %v184 = vlaneseq
    %v185 = vshrl.u32 %v184, 7
    %v186 = vsub.s32 %v163, %v185
    %v187 = vrot.slane %v134, %v186
    %v188 = vsel %vm168, %v187, %v183
    %vm189 = vcmask 1041409
    %v190 = vsel %vm189, %v188, %v169
    %v192 = vadd.f32 %v94, %v190
    %vm193 = vcmask 254976
    %194 = vst.msk [vmem:[#allocation2] sm:$0x3] %vm193, %v192
    // Predicated region
    $region58: #{tpu_custom_call.1} parent=1 // pred_check
      %p195 = pneg %p88
    $region59: #{tpu_custom_call.1} parent=1 // pred_check_branch
      %197 = sbr.rel (%p195) target = $region61
    $region60: #{tpu_custom_call.1} parent=1 // pred_region
      %v198 = vld [vmem:[#allocation2] sm:$0x3]
      %v199 = vld [vmem:[#allocation6] sm:$0xff]
      %v200 = vld [vmem:[#allocation6 + $0x8] sm:$0xff]
      %v201 = vld [vmem:[#allocation6 + $0x10] sm:$0xff]
      %v202 = vld [vmem:[#allocation6 + $0x18] sm:$0xff]
      %vm203 = vcmask 261120
      %v205 = vsel %vm203, %v198, 0
      %207 = vmatprep.subr.mxu0 0.0
      %208 = vmatpush1.msra.mxu0 %v199
      %209 = vmatprep.subr.mxu0 0.0
      %210 = vmatpush1.msra.mxu0 %v200
      %211 = vmatprep.subr.mxu0 0.0
      %212 = vmatpush1.msra.mxu0 %v201
      %213 = vmatprep.subr.mxu0 0.0
      %214 = vmatpush1.msra.mxu0 %v202
      %215 = vmatprep.subr.mxu0 0.0
      %216 = vmatpush1.msra.mxu0 0.0
      %217 = vmatprep.subr.mxu0 0.0
      %218 = vmatpush1.msra.mxu0 0.0
      %219 = vmatprep.subr.mxu0 0.0
      %220 = vmatpush1.msra.mxu0 0.0
      %221 = vmatprep.subr.mxu0 0.0
      %222 = vmatpush1.msra.mxu0 0.0
      %223 = vmatprep.subr.mxu0 0.0
      %224 = vmatpush1.msra.mxu0 0.0
      %225 = vmatprep.subr.mxu0 0.0
      %226 = vmatpush1.msra.mxu0 0.0
      %227 = vmatprep.subr.mxu0 0.0
      %228 = vmatpush1.msra.mxu0 0.0
      %229 = vmatprep.subr.mxu0 0.0
      %230 = vmatpush1.msra.mxu0 0.0
      %231 = vmatprep.subr.mxu0 0.0
      %232 = vmatpush1.msra.mxu0 0.0
      %233 = vmatprep.subr.mxu0 0.0
      %234 = vmatpush1.msra.mxu0 0.0
      %235 = vmatprep.subr.mxu0 0.0
      %236 = vmatpush1.msra.mxu0 0.0
      %237 = vmatprep.subr.mxu0 0.0
      %238 = vmatpush1.msra.mxu0 0.0
      %239 = vmatprep.subr.mxu0 0.0
      %240 = vmatpush1.msra.mxu0 0.0
      %241 = vmatprep.subr.mxu0 0.0
      %242 = vmatpush1.msra.mxu0 0.0
      %243 = vmatprep.subr.mxu0 0.0
      %244 = vmatpush1.msra.mxu0 0.0
      %245 = vmatprep.subr.mxu0 0.0
      %246 = vmatpush1.msra.mxu0 0.0
      %247 = vmatprep.subr.mxu0 0.0
      %248 = vmatpush1.msra.mxu0 0.0
      %249 = vmatprep.subr.mxu0 0.0
      %250 = vmatpush1.msra.mxu0 0.0
      %251 = vmatprep.subr.mxu0 0.0
      %252 = vmatpush1.msra.mxu0 0.0
      %253 = vmatprep.subr.mxu0 0.0
      %254 = vmatpush1.msra.mxu0 0.0
      %255 = vmatprep.subr.mxu0 0.0
      %256 = vmatpush1.msra.mxu0 0.0
      %257 = vmatprep.subr.mxu0 0.0
      %258 = vmatpush1.msra.mxu0 0.0
      %259 = vmatprep.subr.mxu0 0.0
      %260 = vmatpush1.msra.mxu0 0.0
      %261 = vmatprep.subr.mxu0 0.0
      %262 = vmatpush1.msra.mxu0 0.0
      %263 = vmatprep.subr.mxu0 0.0
      %264 = vmatpush1.msra.mxu0 0.0
      %265 = vmatprep.subr.mxu0 0.0
      %266 = vmatpush1.msra.mxu0 0.0
      %267 = vmatprep.subr.mxu0 0.0
      %268 = vmatpush1.msra.mxu0 0.0
      %269 = vmatprep.subr.mxu0 0.0
      %270 = vmatpush1.msra.mxu0 0.0
      %271 = vmatprep.mubr.f32.mxu0 0.0
      %272 = vmatmul.mubr.f32.gmra.mrb[0].mxu0 %v205
      %v273 = vpop.f32.mrb[0].mxu0
      %v274 = vadd.f32 0.0, %v273
      %v275 = vpop.f32.mrb[0].mxu0
      %276 = vdwg.mxu0
      %v277 = vld [vmem:[%s2] sm:$0x1]
      %v279 = vlaneseq
      %v280 = vshrl.u32 %v279, 7
      %v281 = vsub.s32 0, %v280
      %v282 = vrot.slane %v277, %v281
      %v284 = vmul.f32 %v274, %v282
      %v285 = vld [vmem:[%s3] sm:$0x1]
      %v287 = vlaneseq
      %v288 = vshrl.u32 %v287, 7
      %v289 = vsub.s32 0, %v288
      %v290 = vrot.slane %v285, %v289
      %v292 = vadd.f32 %v284, %v290
      %v293 = vmax.f32 %v292, 0.0
      %v294 = vld [vmem:[#allocation8] sm:$0xff]
      %v295 = vld [vmem:[#allocation8 + $0x8] sm:$0xff]
      %v296 = vld [vmem:[#allocation8 + $0x10] sm:$0xff]
      %v297 = vld [vmem:[#allocation8 + $0x18] sm:$0xff]
      %v298 = vld [vmem:[#allocation8 + $0x20] sm:$0xff]
      %v299 = vld [vmem:[#allocation8 + $0x28] sm:$0xff]
      %v300 = vld [vmem:[#allocation8 + $0x30] sm:$0xff]
      %v301 = vld [vmem:[#allocation8 + $0x38] sm:$0xff]
      %v302 = vld [vmem:[#allocation8 + $0x40] sm:$0xff]
      %v303 = vld [vmem:[#allocation8 + $0x48] sm:$0xff]
      %v304 = vld [vmem:[#allocation8 + $0x50] sm:$0xff]
      %v305 = vld [vmem:[#allocation8 + $0x58] sm:$0xff]
      %v306 = vld [vmem:[#allocation8 + $0x60] sm:$0xff]
      %v307 = vld [vmem:[#allocation8 + $0x68] sm:$0xff]
      %v308 = vld [vmem:[#allocation8 + $0x70] sm:$0xff]
      %v309 = vld [vmem:[#allocation8 + $0x78] sm:$0xff]
      %310 = vmatprep.subr.mxu0 0.0
      %311 = vmatpush1.msra.mxu0 %v294
      %312 = vmatprep.subr.mxu0 0.0
      %313 = vmatpush1.msra.mxu0 %v295
      %314 = vmatprep.subr.mxu0 0.0
      %315 = vmatpush1.msra.mxu0 %v296
      %316 = vmatprep.subr.mxu0 0.0
      %317 = vmatpush1.msra.mxu0 %v297
      %318 = vmatprep.subr.mxu0 0.0
      %319 = vmatpush1.msra.mxu0 %v298
      %320 = vmatprep.subr.mxu0 0.0
      %321 = vmatpush1.msra.mxu0 %v299
      %322 = vmatprep.subr.mxu0 0.0
      %323 = vmatpush1.msra.mxu0 %v300
      %324 = vmatprep.subr.mxu0 0.0
      %325 = vmatpush1.msra.mxu0 %v301
      %326 = vmatprep.subr.mxu0 0.0
      %327 = vmatpush1.msra.mxu0 %v302
      %328 = vmatprep.subr.mxu0 0.0
      %329 = vmatpush1.msra.mxu0 %v303
      %330 = vmatprep.subr.mxu0 0.0
      %331 = vmatpush1.msra.mxu0 %v304
      %332 = vmatprep.subr.mxu0 0.0
      %333 = vmatpush1.msra.mxu0 %v305
      %334 = vmatprep.subr.mxu0 0.0
      %335 = vmatpush1.msra.mxu0 %v306
      %336 = vmatprep.subr.mxu0 0.0
      %337 = vmatpush1.msra.mxu0 %v307
      %338 = vmatprep.subr.mxu0 0.0
      %339 = vmatpush1.msra.mxu0 %v308
      %340 = vmatprep.subr.mxu0 0.0
      %341 = vmatpush1.msra.mxu0 %v309
      %342 = vmatprep.subr.mxu0 0.0
      %343 = vmatpush1.msra.mxu0 0.0
      %344 = vmatprep.subr.mxu0 0.0
      %345 = vmatpush1.msra.mxu0 0.0
      %346 = vmatprep.subr.mxu0 0.0
      %347 = vmatpush1.msra.mxu0 0.0
      %348 = vmatprep.subr.mxu0 0.0
      %349 = vmatpush1.msra.mxu0 0.0
      %350 = vmatprep.subr.mxu0 0.0
      %351 = vmatpush1.msra.mxu0 0.0
      %352 = vmatprep.subr.mxu0 0.0
      %353 = vmatpush1.msra.mxu0 0.0
      %354 = vmatprep.subr.mxu0 0.0
      %355 = vmatpush1.msra.mxu0 0.0
      %356 = vmatprep.subr.mxu0 0.0
      %357 = vmatpush1.msra.mxu0 0.0
      %358 = vmatprep.subr.mxu0 0.0
      %359 = vmatpush1.msra.mxu0 0.0
      %360 = vmatprep.subr.mxu0 0.0
      %361 = vmatpush1.msra.mxu0 0.0
      %362 = vmatprep.subr.mxu0 0.0
      %363 = vmatpush1.msra.mxu0 0.0
      %364 = vmatprep.subr.mxu0 0.0
      %365 = vmatpush1.msra.mxu0 0.0
      %366 = vmatprep.subr.mxu0 0.0
      %367 = vmatpush1.msra.mxu0 0.0
      %368 = vmatprep.subr.mxu0 0.0
      %369 = vmatpush1.msra.mxu0 0.0
      %370 = vmatprep.subr.mxu0 0.0
      %371 = vmatpush1.msra.mxu0 0.0
      %372 = vmatprep.subr.mxu0 0.0
      %373 = vmatpush1.msra.mxu0 0.0
      %374 = vmatprep.mubr.f32.mxu0 0.0
      %375 = vmatmul.mubr.f32.gmra.mrb[0].mxu0 %v293
      %v376 = vpop.f32.mrb[0].mxu0
      %v377 = vadd.f32 0.0, %v376
      %v378 = vpop.f32.mrb[0].mxu0
      %379 = vdwg.mxu0
      %v380 = vld [vmem:[%s5] sm:$0x1]
      %v382 = vlaneseq
      %v383 = vshrl.u32 %v382, 7
      %v384 = vsub.s32 0, %v383
      %v385 = vrot.slane %v380, %v384
      %v387 = vmul.f32 %v377, %v385
      %v388 = vld [vmem:[%s6] sm:$0x1]
      %v390 = vlaneseq
      %v391 = vshrl.u32 %v390, 7
      %v392 = vsub.s32 0, %v391
      %v393 = vrot.slane %v388, %v392
      %v395 = vadd.f32 %v387, %v393
      %v396 = vmax.f32 %v395, 0.0
      %v397 = vld [vmem:[#allocation9] sm:$0xff]
      %v398 = vld [vmem:[#allocation9 + $0x8] sm:$0xff]
      %v399 = vld [vmem:[#allocation9 + $0x10] sm:$0xff]
      %v400 = vld [vmem:[#allocation9 + $0x18] sm:$0xff]
      %v401 = vld [vmem:[#allocation9 + $0x20] sm:$0xff]
      %v402 = vld [vmem:[#allocation9 + $0x28] sm:$0xff]
      %v403 = vld [vmem:[#allocation9 + $0x30] sm:$0xff]
      %v404 = vld [vmem:[#allocation9 + $0x38] sm:$0xff]
      %v405 = vld [vmem:[#allocation9 + $0x40] sm:$0xff]
      %v406 = vld [vmem:[#allocation9 + $0x48] sm:$0xff]
      %v407 = vld [vmem:[#allocation9 + $0x50] sm:$0xff]
      %v408 = vld [vmem:[#allocation9 + $0x58] sm:$0xff]
      %v409 = vld [vmem:[#allocation9 + $0x60] sm:$0xff]
      %v410 = vld [vmem:[#allocation9 + $0x68] sm:$0xff]
      %v411 = vld [vmem:[#allocation9 + $0x70] sm:$0xff]
      %v412 = vld [vmem:[#allocation9 + $0x78] sm:$0xff]
      %v413 = vld [vmem:[%s8] sm:$0x1]
      %v415 = vlaneseq
      %v416 = vshrl.u32 %v415, 7
      %v417 = vsub.s32 0, %v416
      %v418 = vrot.slane %v413, %v417
      %420 = vmatprep.subr.mxu0 0.0
      %421 = vmatpush1.msra.mxu0 %v397
      %422 = vmatprep.subr.mxu0 0.0
      %423 = vmatpush1.msra.mxu0 %v398
      %424 = vmatprep.subr.mxu0 0.0
      %425 = vmatpush1.msra.mxu0 %v399
      %426 = vmatprep.subr.mxu0 0.0
      %427 = vmatpush1.msra.mxu0 %v400
      %428 = vmatprep.subr.mxu0 0.0
      %429 = vmatpush1.msra.mxu0 %v401
      %430 = vmatprep.subr.mxu0 0.0
      %431 = vmatpush1.msra.mxu0 %v402
      %432 = vmatprep.subr.mxu0 0.0
      %433 = vmatpush1.msra.mxu0 %v403
      %434 = vmatprep.subr.mxu0 0.0
      %435 = vmatpush1.msra.mxu0 %v404
      %436 = vmatprep.subr.mxu0 0.0
      %437 = vmatpush1.msra.mxu0 %v405
      %438 = vmatprep.subr.mxu0 0.0
      %439 = vmatpush1.msra.mxu0 %v406
      %440 = vmatprep.subr.mxu0 0.0
      %441 = vmatpush1.msra.mxu0 %v407
      %442 = vmatprep.subr.mxu0 0.0
      %443 = vmatpush1.msra.mxu0 %v408
      %444 = vmatprep.subr.mxu0 0.0
      %445 = vmatpush1.msra.mxu0 %v409
      %446 = vmatprep.subr.mxu0 0.0
      %447 = vmatpush1.msra.mxu0 %v410
      %448 = vmatprep.subr.mxu0 0.0
      %449 = vmatpush1.msra.mxu0 %v411
      %450 = vmatprep.subr.mxu0 0.0
      %451 = vmatpush1.msra.mxu0 %v412
      %452 = vmatprep.subr.mxu0 0.0
      %453 = vmatpush1.msra.mxu0 0.0
      %454 = vmatprep.subr.mxu0 0.0
      %455 = vmatpush1.msra.mxu0 0.0
      %456 = vmatprep.subr.mxu0 0.0
      %457 = vmatpush1.msra.mxu0 0.0
      %458 = vmatprep.subr.mxu0 0.0
      %459 = vmatpush1.msra.mxu0 0.0
      %460 = vmatprep.subr.mxu0 0.0
      %461 = vmatpush1.msra.mxu0 0.0
      %462 = vmatprep.subr.mxu0 0.0
      %463 = vmatpush1.msra.mxu0 0.0
      %464 = vmatprep.subr.mxu0 0.0
      %465 = vmatpush1.msra.mxu0 0.0
      %466 = vmatprep.subr.mxu0 0.0
      %467 = vmatpush1.msra.mxu0 0.0
      %468 = vmatprep.subr.mxu0 0.0
      %469 = vmatpush1.msra.mxu0 0.0
      %470 = vmatprep.subr.mxu0 0.0
      %471 = vmatpush1.msra.mxu0 0.0
      %472 = vmatprep.subr.mxu0 0.0
      %473 = vmatpush1.msra.mxu0 0.0
      %474 = vmatprep.subr.mxu0 0.0
      %475 = vmatpush1.msra.mxu0 0.0
      %476 = vmatprep.subr.mxu0 0.0
      %477 = vmatpush1.msra.mxu0 0.0
      %478 = vmatprep.subr.mxu0 0.0
      %479 = vmatpush1.msra.mxu0 0.0
      %480 = vmatprep.subr.mxu0 0.0
      %481 = vmatpush1.msra.mxu0 0.0
      %482 = vmatprep.subr.mxu0 0.0
      %483 = vmatpush1.msra.mxu0 0.0
      %484 = vmatprep.mubr.f32.mxu0 0.0
      %485 = vmatmul.mubr.f32.gmra.mrb[0].mxu0 %v396
      %v486 = vpop.f32.mrb[0].mxu0
      %v487 = vadd.f32 %v418, %v486
      %v488 = vpop.f32.mrb[0].mxu0
      %489 = vdwg.mxu0
      %490 = vst [vmem:[#allocation11] sm:$0x3] %v487
    $region61: #{tpu_custom_call.1} parent=1 // pred_fallthru
      _
    // Predicated region
    $region62: #{tpu_custom_call.1} parent=1 // pred_check
      _
    $region63: #{tpu_custom_call.1} parent=1 // pred_check_branch
      %492 = sbr.rel (0) target = $region65
    $region64: #{tpu_custom_call.1} parent=1 // pred_region
      %s494 = ssub.s32 32, 32
      %495 = vsyncadd [#allocation5], %s494
      %s497 = sshll.u32 [#allocation11], 4
      %s498 = int_to_ptr.vmem [resolvable:$true] %s497
      %500 = dma.vmem_to_hbm [thread:$0]  %s498, 32, %s9, [#allocation5]
    $region65: #{tpu_custom_call.1} parent=1 // pred_fallthru
      _
    // Predicated region
    $region66: #{tpu_custom_call.1} parent=1 // pred_check
      _
    $region67: #{tpu_custom_call.1} parent=1 // pred_check_branch
      %502 = sbr.rel (0) target = $region69
    $region68: #{tpu_custom_call.1} parent=1 // pred_region
      %503 = dma.done [#allocation5], 32
    $region69: #{tpu_custom_call.1} parent=1 // pred_fallthru
      _
    %504 = vsyncpa [#allocation4], 1
    %505 = vsyncpa [#allocation7], 1
    %506 = vsyncpa [#allocation10], 1
    %507 = vsyncpa [#allocation5], 1

// kernel: tpu_custom_call.1
$region0: #{tpu_custom_call.1}
  #allocation0 [shape = 'u32[]', space=smem, size = 0x4, offset = 0x4, fixed_abs, tag = 'smem constant byte address 0x4 - core index']
  #allocation1 [shape = 'u32[144,128]{1,0:T(1,128)}', space=vmem, size = 0x12000, scoped, tag = 'internal scratch']
  #allocation2 [shape = 'f32[2,32]{1,0:T(2,128)}', space=vmem, size = 0x400, scoped, tag = 'scratch operand']
  %s0 = inlined_call_operand.hbm [shape: f32[2,32,256], index: 0, kind: input, shape index: {}]
  %s1 = inlined_call_operand.hbm [shape: f32[32,128], index: 1, kind: input, shape index: {}]
  %s2 = inlined_call_operand.vmem [shape: f32[1,128], index: 2, kind: input, shape index: {}]
  %s3 = inlined_call_operand.vmem [shape: f32[1,128], index: 3, kind: input, shape index: {}]
  %s4 = inlined_call_operand.hbm [shape: f32[128,128], index: 4, kind: input, shape index: {}]
  %s5 = inlined_call_operand.vmem [shape: f32[1,128], index: 5, kind: input, shape index: {}]
  %s6 = inlined_call_operand.vmem [shape: f32[1,128], index: 6, kind: input, shape index: {}]
  %s7 = inlined_call_operand.hbm [shape: f32[128,128], index: 7, kind: input, shape index: {}]
  %s8 = inlined_call_operand.vmem [shape: f32[1,128], index: 8, kind: input, shape index: {}]
  %s9 = inlined_call_operand.hbm [shape: f32[2,128], index: 9, kind: output, shape index: {}]
  %s10 = sld [smem:[#allocation0]]
  $region70: #{tpu_custom_call.1} parent=0
    _
  %s12 = ssub.s32 1, %s10
  %s13 = scalar_select 0, %s12, %s10
  $region1: #{tpu_custom_call.1} parent=0
    #allocation3 [shape = 'u8[65536]{0}', space=vmem, size = 0x10000, scoped, tag = 'input window, operand 0, single buffered']
    #allocation4 [shape = 's32[1]{0}', space=sflag, size = 0x4, scoped, tag = 'scoped memory for tpu_custom_call.1']
    #allocation5 [shape = 's32[1]{0}', space=sflag, size = 0x4, scoped, tag = 'scoped memory for tpu_custom_call.1']
    #allocation6 [shape = 'u8[16384]{0}', space=vmem, size = 0x4000, scoped, tag = 'input window, operand 1, single buffered']
    #allocation7 [shape = 's32[1]{0}', space=sflag, size = 0x4, scoped, tag = 'scoped memory for tpu_custom_call.1']
    #allocation8 [shape = 'u8[65536]{0}', space=vmem, size = 0x10000, scoped, tag = 'input window, operand 4, single buffered']
    #allocation9 [shape = 'u8[65536]{0}', space=vmem, size = 0x10000, scoped, tag = 'input window, operand 7, single buffered']
    #allocation10 [shape = 's32[1]{0}', space=sflag, size = 0x4, scoped, tag = 'scoped memory for tpu_custom_call.1']
    #allocation11 [shape = 'u8[1024]{0}', space=vmem, size = 0x400, scoped, tag = 'output window, operand 0, single buffered']
    %14 = vsyncpa [#allocation4], 0
    %15 = vsyncpa [#allocation7], 0
    %16 = vsyncpa [#allocation10], 0
    %17 = vsyncpa [#allocation5], 0
    // Predicated region
    $region2: #{tpu_custom_call.1} parent=1 // pred_check
      _
    $region3: #{tpu_custom_call.1} parent=1 // pred_check_branch
      %19 = sbr.rel (0) target = $region5
    $region4: #{tpu_custom_call.1} parent=1 // pred_region
      %s21 = ssub.s32 2048, 2048
      %22 = vsyncadd [#allocation4], %s21
      %s23 = sshll.u32 [#allocation3], 4
      %s24 = int_to_ptr.vmem [resolvable:$true] %s23
      %29 = dma.hbm_to_vmem [thread:$0]  %s0, 2048, %s24, [#allocation4], 256, 256, 16
    $region5: #{tpu_custom_call.1} parent=1 // pred_fallthru
      _
    // Predicated region
    $region6: #{tpu_custom_call.1} parent=1 // pred_check
      _
    $region7: #{tpu_custom_call.1} parent=1 // pred_check_branch
      %31 = sbr.rel (0) target = $region9
    $region8: #{tpu_custom_call.1} parent=1 // pred_region
      %s33 = ssub.s32 512, 512
      %34 = vsyncadd [#allocation7], %s33
      %s35 = sshll.u32 [#allocation6], 4
      %s36 = int_to_ptr.vmem [resolvable:$true] %s35
      %41 = dma.hbm_to_vmem [thread:$0]  %s1, 512, %s36, [#allocation7], 128, 128, 8
    $region9: #{tpu_custom_call.1} parent=1 // pred_fallthru
      _
    // Predicated region
    $region10: #{tpu_custom_call.1} parent=1 // pred_check
      _
    $region11: #{tpu_custom_call.1} parent=1 // pred_check_branch
      %43 = sbr.rel (0) target = $region13
    $region12: #{tpu_custom_call.1} parent=1 // pred_region
      _
    $region13: #{tpu_custom_call.1} parent=1 // pred_fallthru
      _
    // Predicated region
    $region14: #{tpu_custom_call.1} parent=1 // pred_check
      _
    $region15: #{tpu_custom_call.1} parent=1 // pred_check_branch
      %45 = sbr.rel (0) target = $region17
    $region16: #{tpu_custom_call.1} parent=1 // pred_region
      _
    $region17: #{tpu_custom_call.1} parent=1 // pred_fallthru
      _
    // Predicated region
    $region18: #{tpu_custom_call.1} parent=1 // pred_check
      _
    $region19: #{tpu_custom_call.1} parent=1 // pred_check_branch
      %47 = sbr.rel (0) target = $region21
    $region20: #{tpu_custom_call.1} parent=1 // pred_region
      %s49 = ssub.s32 2048, 2048
      %50 = vsyncadd [#allocation7], %s49
      %s51 = sshll.u32 [#allocation8], 4
      %s52 = int_to_ptr.vmem [resolvable:$true] %s51
      %57 = dma.hbm_to_vmem [thread:$0]  %s4, 2048, %s52, [#allocation7], 128, 128, 8
    $region21: #{tpu_custom_call.1} parent=1 // pred_fallthru
      _
    // Predicated region
    $region22: #{tpu_custom_call.1} parent=1 // pred_check
      _
    $region23: #{tpu_custom_call.1} parent=1 // pred_check_branch
      %59 = sbr.rel (0) target = $region25
    $region24: #{tpu_custom_call.1} parent=1 // pred_region
      _
    $region25: #{tpu_custom_call.1} parent=1 // pred_fallthru
      _
    // Predicated region
    $region26: #{tpu_custom_call.1} parent=1 // pred_check
      _
    $region27: #{tpu_custom_call.1} parent=1 // pred_check_branch
      %61 = sbr.rel (0) target = $region29
    $region28: #{tpu_custom_call.1} parent=1 // pred_region
      _
    $region29: #{tpu_custom_call.1} parent=1 // pred_fallthru
      _
    // Predicated region
    $region30: #{tpu_custom_call.1} parent=1 // pred_check
      _
    $region31: #{tpu_custom_call.1} parent=1 // pred_check_branch
      %63 = sbr.rel (0) target = $region33
    $region32: #{tpu_custom_call.1} parent=1 // pred_region
      %s65 = ssub.s32 2048, 2048
      %66 = vsyncadd [#allocation10], %s65
      %s67 = sshll.u32 [#allocation9], 4
      %s68 = int_to_ptr.vmem [resolvable:$true] %s67
      %73 = dma.hbm_to_vmem [thread:$0]  %s7, 2048, %s68, [#allocation10], 128, 128, 8
    $region33: #{tpu_custom_call.1} parent=1 // pred_fallthru
      _
    // Predicated region
    $region34: #{tpu_custom_call.1} parent=1 // pred_check
      _
    $region35: #{tpu_custom_call.1} parent=1 // pred_check_branch
      %75 = sbr.rel (0) target = $region37
    $region36: #{tpu_custom_call.1} parent=1 // pred_region
      _
    $region37: #{tpu_custom_call.1} parent=1 // pred_fallthru
      _
    // Predicated region
    $region38: #{tpu_custom_call.1} parent=1 // pred_check
      _
    $region39: #{tpu_custom_call.1} parent=1 // pred_check_branch
      %77 = sbr.rel (0) target = $region41
    $region40: #{tpu_custom_call.1} parent=1 // pred_region
      %78 = dma.done [#allocation4], 2048
    $region41: #{tpu_custom_call.1} parent=1 // pred_fallthru
      _
    // Predicated region
    $region42: #{tpu_custom_call.1} parent=1 // pred_check
      _
    $region43: #{tpu_custom_call.1} parent=1 // pred_check_branch
      %80 = sbr.rel (0) target = $region45
    $region44: #{tpu_custom_call.1} parent=1 // pred_region
      %81 = dma.done [#allocation7], 512
    $region45: #{tpu_custom_call.1} parent=1 // pred_fallthru
      _
    // Predicated region
    $region46: #{tpu_custom_call.1} parent=1 // pred_check
      _
    $region47: #{tpu_custom_call.1} parent=1 // pred_check_branch
      %83 = sbr.rel (0) target = $region49
    $region48: #{tpu_custom_call.1} parent=1 // pred_region
      %84 = dma.done [#allocation7], 2048
    $region49: #{tpu_custom_call.1} parent=1 // pred_fallthru
      _
    // Predicated region
    $region50: #{tpu_custom_call.1} parent=1 // pred_check
      _
    $region51: #{tpu_custom_call.1} parent=1 // pred_check_branch
      %86 = sbr.rel (0) target = $region53
    $region52: #{tpu_custom_call.1} parent=1 // pred_region
      %87 = dma.done [#allocation10], 2048
    $region53: #{tpu_custom_call.1} parent=1 // pred_fallthru
      _
    %p88 = scmp.eq.s32.totalorder 0, 0
    // Predicated region
    $region54: #{tpu_custom_call.1} parent=1 // pred_check
      %p89 = pneg %p88
    $region55: #{tpu_custom_call.1} parent=1 // pred_check_branch
      %91 = sbr.rel (%p89) target = $region57
    $region56: #{tpu_custom_call.1} parent=1 // pred_region
      %vm92 = vcmask 254976
      %93 = vst.msk [vmem:[#allocation2] sm:$0x3] %vm92, 0.0
    $region57: #{tpu_custom_call.1} parent=1 // pred_fallthru
      _
    %v94 = vld [vmem:[#allocation2] sm:$0x3]
    %v95 = vld [vmem:[#allocation3] sm:$0xff]
    %v96 = vld [vmem:[#allocation3 + $0x8] sm:$0xff]
    %v97 = vld [vmem:[#allocation3 + $0x10] sm:$0xff]
    %v98 = vld [vmem:[#allocation3 + $0x18] sm:$0xff]
    %v99 = vld [vmem:[#allocation3 + $0x20] sm:$0xff]
    %v100 = vld [vmem:[#allocation3 + $0x28] sm:$0xff]
    %v101 = vld [vmem:[#allocation3 + $0x30] sm:$0xff]
    %v102 = vld [vmem:[#allocation3 + $0x38] sm:$0xff]
    %v103 = vld [vmem:[#allocation3 + $0x40] sm:$0xff]
    %v104 = vld [vmem:[#allocation3 + $0x48] sm:$0xff]
    %v105 = vld [vmem:[#allocation3 + $0x50] sm:$0xff]
    %v106 = vld [vmem:[#allocation3 + $0x58] sm:$0xff]
    %v107 = vld [vmem:[#allocation3 + $0x60] sm:$0xff]
    %v108 = vld [vmem:[#allocation3 + $0x68] sm:$0xff]
    %v109 = vld [vmem:[#allocation3 + $0x70] sm:$0xff]
    %v110 = vld [vmem:[#allocation3 + $0x78] sm:$0xff]
    %v111 = vadd.f32 %v95, %v96
    %112 = vadd.xlane.f32.xlu0 %v111
    %v113 = vpop.xlane.xlu0 %112
    %v114 = vadd.f32 %v97, %v98
    %115 = vadd.xlane.f32.xlu0 %v114
    %v116 = vpop.xlane.xlu0 %115
    %v117 = vadd.f32 %v99, %v100
    %118 = vadd.xlane.f32.xlu0 %v117
    %v119 = vpop.xlane.xlu0 %118
    %v120 = vadd.f32 %v101, %v102
    %121 = vadd.xlane.f32.xlu0 %v120
    %v122 = vpop.xlane.xlu0 %121
    %v123 = vadd.f32 %v103, %v104
    %124 = vadd.xlane.f32.xlu0 %v123
    %v125 = vpop.xlane.xlu0 %124
    %v126 = vadd.f32 %v105, %v106
    %127 = vadd.xlane.f32.xlu0 %v126
    %v128 = vpop.xlane.xlu0 %127
    %v129 = vadd.f32 %v107, %v108
    %130 = vadd.xlane.f32.xlu0 %v129
    %v131 = vpop.xlane.xlu0 %130
    %v132 = vadd.f32 %v109, %v110
    %133 = vadd.xlane.f32.xlu0 %v132
    %v134 = vpop.xlane.xlu0 %133
    %v143 = vlaneseq
    %v144 = vand.u32 %v143, 127
    %v145 = vlaneseq
    %v146 = vshrl.u32 %v145, 7
    %v147 = vsub.s32 %v144, %v146
    %v148 = vrot.slane %v113, %v147
    %v149 = vadd.s32 %v144, 4294967288
    %v150 = vlaneseq
    %v151 = vshrl.u32 %v150, 7
    %v152 = vsub.s32 %v149, %v151
    %v153 = vrot.slane %v116, %v152
    %vm154 = vcmask 130112
    %v155 = vsel %vm154, %v153, %v148
    %v156 = vadd.s32 %v144, 4294967280
    %v157 = vlaneseq
    %v158 = vshrl.u32 %v157, 7
    %v159 = vsub.s32 %v156, %v158
    %v160 = vrot.slane %v119, %v159
    %vm161 = vcmask 195712
    %v162 = vsel %vm161, %v160, %v155
    %v163 = vadd.s32 %v144, 4294967272
    %v164 = vlaneseq
    %v165 = vshrl.u32 %v164, 7
    %v166 = vsub.s32 %v163, %v165
    %v167 = vrot.slane %v122, %v166
    %vm168 = vcmask 261312
    %v169 = vsel %vm168, %v167, %v162
    %v170 = vlaneseq
    %v171 = vshrl.u32 %v170, 7
    %v172 = vsub.s32 %v144, %v171
    %v173 = vrot.slane %v125, %v172
    %v174 = vlaneseq
    %v175 = vshrl.u32 %v174, 7
    %v176 = vsub.s32 %v149, %v175
    %v177 = vrot.slane %v128, %v176
    %v178 = vsel %vm154, %v177, %v173
    %v179 = vlaneseq
    %v180 = vshrl.u32 %v179, 7
    %v181 = vsub.s32 %v156, %v180
    %v182 = vrot.slane %v131, %v181
    %v183 = vsel %vm161, %v182, %v178
    %v184 = vlaneseq
    %v185 = vshrl.u32 %v184, 7
    %v186 = vsub.s32 %v163, %v185
    %v187 = vrot.slane %v134, %v186
    %v188 = vsel %vm168, %v187, %v183
    %vm189 = vcmask 1041409
    %v190 = vsel %vm189, %v188, %v169
    %v192 = vadd.f32 %v94, %v190
    %vm193 = vcmask 254976
    %194 = vst.msk [vmem:[#allocation2] sm:$0x3] %vm193, %v192
    // Predicated region
    $region58: #{tpu_custom_call.1} parent=1 // pred_check
      %p195 = pneg %p88
    $region59: #{tpu_custom_call.1} parent=1 // pred_check_branch
      %197 = sbr.rel (%p195) target = $region61
    $region60: #{tpu_custom_call.1} parent=1 // pred_region
      %v198 = vld [vmem:[#allocation2] sm:$0x3]
      %v199 = vld [vmem:[#allocation6] sm:$0xff]
      %v200 = vld [vmem:[#allocation6 + $0x8] sm:$0xff]
      %v201 = vld [vmem:[#allocation6 + $0x10] sm:$0xff]
      %v202 = vld [vmem:[#allocation6 + $0x18] sm:$0xff]
      %vm203 = vcmask 261120
      %v205 = vsel %vm203, %v198, 0
      %207 = vmatprep.subr.mxu0 0.0
      %208 = vmatpush1.msra.mxu0 %v199
      %209 = vmatprep.subr.mxu0 0.0
      %210 = vmatpush1.msra.mxu0 %v200
      %211 = vmatprep.subr.mxu0 0.0
      %212 = vmatpush1.msra.mxu0 %v201
      %213 = vmatprep.subr.mxu0 0.0
      %214 = vmatpush1.msra.mxu0 %v202
      %215 = vmatprep.subr.mxu0 0.0
      %216 = vmatpush1.msra.mxu0 0.0
      %217 = vmatprep.subr.mxu0 0.0
      %218 = vmatpush1.msra.mxu0 0.0
      %219 = vmatprep.subr.mxu0 0.0
      %220 = vmatpush1.msra.mxu0 0.0
      %221 = vmatprep.subr.mxu0 0.0
      %222 = vmatpush1.msra.mxu0 0.0
      %223 = vmatprep.subr.mxu0 0.0
      %224 = vmatpush1.msra.mxu0 0.0
      %225 = vmatprep.subr.mxu0 0.0
      %226 = vmatpush1.msra.mxu0 0.0
      %227 = vmatprep.subr.mxu0 0.0
      %228 = vmatpush1.msra.mxu0 0.0
      %229 = vmatprep.subr.mxu0 0.0
      %230 = vmatpush1.msra.mxu0 0.0
      %231 = vmatprep.subr.mxu0 0.0
      %232 = vmatpush1.msra.mxu0 0.0
      %233 = vmatprep.subr.mxu0 0.0
      %234 = vmatpush1.msra.mxu0 0.0
      %235 = vmatprep.subr.mxu0 0.0
      %236 = vmatpush1.msra.mxu0 0.0
      %237 = vmatprep.subr.mxu0 0.0
      %238 = vmatpush1.msra.mxu0 0.0
      %239 = vmatprep.subr.mxu0 0.0
      %240 = vmatpush1.msra.mxu0 0.0
      %241 = vmatprep.subr.mxu0 0.0
      %242 = vmatpush1.msra.mxu0 0.0
      %243 = vmatprep.subr.mxu0 0.0
      %244 = vmatpush1.msra.mxu0 0.0
      %245 = vmatprep.subr.mxu0 0.0
      %246 = vmatpush1.msra.mxu0 0.0
      %247 = vmatprep.subr.mxu0 0.0
      %248 = vmatpush1.msra.mxu0 0.0
      %249 = vmatprep.subr.mxu0 0.0
      %250 = vmatpush1.msra.mxu0 0.0
      %251 = vmatprep.subr.mxu0 0.0
      %252 = vmatpush1.msra.mxu0 0.0
      %253 = vmatprep.subr.mxu0 0.0
      %254 = vmatpush1.msra.mxu0 0.0
      %255 = vmatprep.subr.mxu0 0.0
      %256 = vmatpush1.msra.mxu0 0.0
      %257 = vmatprep.subr.mxu0 0.0
      %258 = vmatpush1.msra.mxu0 0.0
      %259 = vmatprep.subr.mxu0 0.0
      %260 = vmatpush1.msra.mxu0 0.0
      %261 = vmatprep.subr.mxu0 0.0
      %262 = vmatpush1.msra.mxu0 0.0
      %263 = vmatprep.subr.mxu0 0.0
      %264 = vmatpush1.msra.mxu0 0.0
      %265 = vmatprep.subr.mxu0 0.0
      %266 = vmatpush1.msra.mxu0 0.0
      %267 = vmatprep.subr.mxu0 0.0
      %268 = vmatpush1.msra.mxu0 0.0
      %269 = vmatprep.subr.mxu0 0.0
      %270 = vmatpush1.msra.mxu0 0.0
      %271 = vmatprep.mubr.f32.mxu0 0.0
      %272 = vmatmul.mubr.f32.gmra.mrb[0].mxu0 %v205
      %v273 = vpop.f32.mrb[0].mxu0
      %v274 = vadd.f32 0.0, %v273
      %v275 = vpop.f32.mrb[0].mxu0
      %276 = vdwg.mxu0
      %v277 = vld [vmem:[%s2] sm:$0x1]
      %v279 = vlaneseq
      %v280 = vshrl.u32 %v279, 7
      %v281 = vsub.s32 0, %v280
      %v282 = vrot.slane %v277, %v281
      %v284 = vmul.f32 %v274, %v282
      %v285 = vld [vmem:[%s3] sm:$0x1]
      %v287 = vlaneseq
      %v288 = vshrl.u32 %v287, 7
      %v289 = vsub.s32 0, %v288
      %v290 = vrot.slane %v285, %v289
      %v292 = vadd.f32 %v284, %v290
      %v293 = vmax.f32 %v292, 0.0
      %v294 = vld [vmem:[#allocation8] sm:$0xff]
      %v295 = vld [vmem:[#allocation8 + $0x8] sm:$0xff]
      %v296 = vld [vmem:[#allocation8 + $0x10] sm:$0xff]
      %v297 = vld [vmem:[#allocation8 + $0x18] sm:$0xff]
      %v298 = vld [vmem:[#allocation8 + $0x20] sm:$0xff]
      %v299 = vld [vmem:[#allocation8 + $0x28] sm:$0xff]
      %v300 = vld [vmem:[#allocation8 + $0x30] sm:$0xff]
      %v301 = vld [vmem:[#allocation8 + $0x38] sm:$0xff]
      %v302 = vld [vmem:[#allocation8 + $0x40] sm:$0xff]
      %v303 = vld [vmem:[#allocation8 + $0x48] sm:$0xff]
      %v304 = vld [vmem:[#allocation8 + $0x50] sm:$0xff]
      %v305 = vld [vmem:[#allocation8 + $0x58] sm:$0xff]
      %v306 = vld [vmem:[#allocation8 + $0x60] sm:$0xff]
      %v307 = vld [vmem:[#allocation8 + $0x68] sm:$0xff]
      %v308 = vld [vmem:[#allocation8 + $0x70] sm:$0xff]
      %v309 = vld [vmem:[#allocation8 + $0x78] sm:$0xff]
      %310 = vmatprep.subr.mxu0 0.0
      %311 = vmatpush1.msra.mxu0 %v294
      %312 = vmatprep.subr.mxu0 0.0
      %313 = vmatpush1.msra.mxu0 %v295
      %314 = vmatprep.subr.mxu0 0.0
      %315 = vmatpush1.msra.mxu0 %v296
      %316 = vmatprep.subr.mxu0 0.0
      %317 = vmatpush1.msra.mxu0 %v297
      %318 = vmatprep.subr.mxu0 0.0
      %319 = vmatpush1.msra.mxu0 %v298
      %320 = vmatprep.subr.mxu0 0.0
      %321 = vmatpush1.msra.mxu0 %v299
      %322 = vmatprep.subr.mxu0 0.0
      %323 = vmatpush1.msra.mxu0 %v300
      %324 = vmatprep.subr.mxu0 0.0
      %325 = vmatpush1.msra.mxu0 %v301
      %326 = vmatprep.subr.mxu0 0.0
      %327 = vmatpush1.msra.mxu0 %v302
      %328 = vmatprep.subr.mxu0 0.0
      %329 = vmatpush1.msra.mxu0 %v303
      %330 = vmatprep.subr.mxu0 0.0
      %331 = vmatpush1.msra.mxu0 %v304
      %332 = vmatprep.subr.mxu0 0.0
      %333 = vmatpush1.msra.mxu0 %v305
      %334 = vmatprep.subr.mxu0 0.0
      %335 = vmatpush1.msra.mxu0 %v306
      %336 = vmatprep.subr.mxu0 0.0
      %337 = vmatpush1.msra.mxu0 %v307
      %338 = vmatprep.subr.mxu0 0.0
      %339 = vmatpush1.msra.mxu0 %v308
      %340 = vmatprep.subr.mxu0 0.0
      %341 = vmatpush1.msra.mxu0 %v309
      %342 = vmatprep.subr.mxu0 0.0
      %343 = vmatpush1.msra.mxu0 0.0
      %344 = vmatprep.subr.mxu0 0.0
      %345 = vmatpush1.msra.mxu0 0.0
      %346 = vmatprep.subr.mxu0 0.0
      %347 = vmatpush1.msra.mxu0 0.0
      %348 = vmatprep.subr.mxu0 0.0
      %349 = vmatpush1.msra.mxu0 0.0
      %350 = vmatprep.subr.mxu0 0.0
      %351 = vmatpush1.msra.mxu0 0.0
      %352 = vmatprep.subr.mxu0 0.0
      %353 = vmatpush1.msra.mxu0 0.0
      %354 = vmatprep.subr.mxu0 0.0
      %355 = vmatpush1.msra.mxu0 0.0
      %356 = vmatprep.subr.mxu0 0.0
      %357 = vmatpush1.msra.mxu0 0.0
      %358 = vmatprep.subr.mxu0 0.0
      %359 = vmatpush1.msra.mxu0 0.0
      %360 = vmatprep.subr.mxu0 0.0
      %361 = vmatpush1.msra.mxu0 0.0
      %362 = vmatprep.subr.mxu0 0.0
      %363 = vmatpush1.msra.mxu0 0.0
      %364 = vmatprep.subr.mxu0 0.0
      %365 = vmatpush1.msra.mxu0 0.0
      %366 = vmatprep.subr.mxu0 0.0
      %367 = vmatpush1.msra.mxu0 0.0
      %368 = vmatprep.subr.mxu0 0.0
      %369 = vmatpush1.msra.mxu0 0.0
      %370 = vmatprep.subr.mxu0 0.0
      %371 = vmatpush1.msra.mxu0 0.0
      %372 = vmatprep.subr.mxu0 0.0
      %373 = vmatpush1.msra.mxu0 0.0
      %374 = vmatprep.mubr.f32.mxu0 0.0
      %375 = vmatmul.mubr.f32.gmra.mrb[0].mxu0 %v293
      %v376 = vpop.f32.mrb[0].mxu0
      %v377 = vadd.f32 0.0, %v376
      %v378 = vpop.f32.mrb[0].mxu0
      %379 = vdwg.mxu0
      %v380 = vld [vmem:[%s5] sm:$0x1]
      %v382 = vlaneseq
      %v383 = vshrl.u32 %v382, 7
      %v384 = vsub.s32 0, %v383
      %v385 = vrot.slane %v380, %v384
      %v387 = vmul.f32 %v377, %v385
      %v388 = vld [vmem:[%s6] sm:$0x1]
      %v390 = vlaneseq
      %v391 = vshrl.u32 %v390, 7
      %v392 = vsub.s32 0, %v391
      %v393 = vrot.slane %v388, %v392
      %v395 = vadd.f32 %v387, %v393
      %v396 = vmax.f32 %v395, 0.0
      %v397 = vld [vmem:[#allocation9] sm:$0xff]
      %v398 = vld [vmem:[#allocation9 + $0x8] sm:$0xff]
      %v399 = vld [vmem:[#allocation9 + $0x10] sm:$0xff]
      %v400 = vld [vmem:[#allocation9 + $0x18] sm:$0xff]
      %v401 = vld [vmem:[#allocation9 + $0x20] sm:$0xff]
      %v402 = vld [vmem:[#allocation9 + $0x28] sm:$0xff]
      %v403 = vld [vmem:[#allocation9 + $0x30] sm:$0xff]
      %v404 = vld [vmem:[#allocation9 + $0x38] sm:$0xff]
      %v405 = vld [vmem:[#allocation9 + $0x40] sm:$0xff]
      %v406 = vld [vmem:[#allocation9 + $0x48] sm:$0xff]
      %v407 = vld [vmem:[#allocation9 + $0x50] sm:$0xff]
      %v408 = vld [vmem:[#allocation9 + $0x58] sm:$0xff]
      %v409 = vld [vmem:[#allocation9 + $0x60] sm:$0xff]
      %v410 = vld [vmem:[#allocation9 + $0x68] sm:$0xff]
      %v411 = vld [vmem:[#allocation9 + $0x70] sm:$0xff]
      %v412 = vld [vmem:[#allocation9 + $0x78] sm:$0xff]
      %v413 = vld [vmem:[%s8] sm:$0x1]
      %v415 = vlaneseq
      %v416 = vshrl.u32 %v415, 7
      %v417 = vsub.s32 0, %v416
      %v418 = vrot.slane %v413, %v417
      %420 = vmatprep.subr.mxu0 0.0
      %421 = vmatpush1.msra.mxu0 %v397
      %422 = vmatprep.subr.mxu0 0.0
      %423 = vmatpush1.msra.mxu0 %v398
      %424 = vmatprep.subr.mxu0 0.0
      %425 = vmatpush1.msra.mxu0 %v399
      %426 = vmatprep.subr.mxu0 0.0
      %427 = vmatpush1.msra.mxu0 %v400
      %428 = vmatprep.subr.mxu0 0.0
      %429 = vmatpush1.msra.mxu0 %v401
      %430 = vmatprep.subr.mxu0 0.0
      %431 = vmatpush1.msra.mxu0 %v402
      %432 = vmatprep.subr.mxu0 0.0
      %433 = vmatpush1.msra.mxu0 %v403
      %434 = vmatprep.subr.mxu0 0.0
      %435 = vmatpush1.msra.mxu0 %v404
      %436 = vmatprep.subr.mxu0 0.0
      %437 = vmatpush1.msra.mxu0 %v405
      %438 = vmatprep.subr.mxu0 0.0
      %439 = vmatpush1.msra.mxu0 %v406
      %440 = vmatprep.subr.mxu0 0.0
      %441 = vmatpush1.msra.mxu0 %v407
      %442 = vmatprep.subr.mxu0 0.0
      %443 = vmatpush1.msra.mxu0 %v408
      %444 = vmatprep.subr.mxu0 0.0
      %445 = vmatpush1.msra.mxu0 %v409
      %446 = vmatprep.subr.mxu0 0.0
      %447 = vmatpush1.msra.mxu0 %v410
      %448 = vmatprep.subr.mxu0 0.0
      %449 = vmatpush1.msra.mxu0 %v411
      %450 = vmatprep.subr.mxu0 0.0
      %451 = vmatpush1.msra.mxu0 %v412
      %452 = vmatprep.subr.mxu0 0.0
      %453 = vmatpush1.msra.mxu0 0.0
      %454 = vmatprep.subr.mxu0 0.0
      %455 = vmatpush1.msra.mxu0 0.0
      %456 = vmatprep.subr.mxu0 0.0
      %457 = vmatpush1.msra.mxu0 0.0
      %458 = vmatprep.subr.mxu0 0.0
      %459 = vmatpush1.msra.mxu0 0.0
      %460 = vmatprep.subr.mxu0 0.0
      %461 = vmatpush1.msra.mxu0 0.0
      %462 = vmatprep.subr.mxu0 0.0
      %463 = vmatpush1.msra.mxu0 0.0
      %464 = vmatprep.subr.mxu0 0.0
      %465 = vmatpush1.msra.mxu0 0.0
      %466 = vmatprep.subr.mxu0 0.0
      %467 = vmatpush1.msra.mxu0 0.0
      %468 = vmatprep.subr.mxu0 0.0
      %469 = vmatpush1.msra.mxu0 0.0
      %470 = vmatprep.subr.mxu0 0.0
      %471 = vmatpush1.msra.mxu0 0.0
      %472 = vmatprep.subr.mxu0 0.0
      %473 = vmatpush1.msra.mxu0 0.0
      %474 = vmatprep.subr.mxu0 0.0
      %475 = vmatpush1.msra.mxu0 0.0
      %476 = vmatprep.subr.mxu0 0.0
      %477 = vmatpush1.msra.mxu0 0.0
      %478 = vmatprep.subr.mxu0 0.0
      %479 = vmatpush1.msra.mxu0 0.0
      %480 = vmatprep.subr.mxu0 0.0
      %481 = vmatpush1.msra.mxu0 0.0
      %482 = vmatprep.subr.mxu0 0.0
      %483 = vmatpush1.msra.mxu0 0.0
      %484 = vmatprep.mubr.f32.mxu0 0.0
      %485 = vmatmul.mubr.f32.gmra.mrb[0].mxu0 %v396
      %v486 = vpop.f32.mrb[0].mxu0
      %v487 = vadd.f32 %v418, %v486
      %v488 = vpop.f32.mrb[0].mxu0
      %489 = vdwg.mxu0
      %490 = vst [vmem:[#allocation11] sm:$0x3] %v487
    $region61: #{tpu_custom_call.1} parent=1 // pred_fallthru
      _
    // Predicated region
    $region62: #{tpu_custom_call.1} parent=1 // pred_check
      _
    $region63: #{tpu_custom_call.1} parent=1 // pred_check_branch
      %492 = sbr.rel (0) target = $region65
    $region64: #{tpu_custom_call.1} parent=1 // pred_region
      %s494 = ssub.s32 32, 32
      %495 = vsyncadd [#allocation5], %s494
      %s497 = sshll.u32 [#allocation11], 4
      %s498 = int_to_ptr.vmem [resolvable:$true] %s497
      %500 = dma.vmem_to_hbm [thread:$0]  %s498, 32, %s9, [#allocation5]
    $region65: #{tpu_custom_call.1} parent=1 // pred_fallthru
      _
    // Predicated region
    $region66: #{tpu_custom_call.1} parent=1 // pred_check
      _
    $region67: #{tpu_custom_call.1} parent=1 // pred_check_branch
      %502 = sbr.rel (0) target = $region69
    $region68: #{tpu_custom_call.1} parent=1 // pred_region
      %503 = dma.done [#allocation5], 32
    $region69: #{tpu_custom_call.1} parent=1 // pred_fallthru
      _
    %504 = vsyncpa [#allocation4], 1
    %505 = vsyncpa [#allocation7], 1
    %506 = vsyncpa [#allocation10], 1
    %507 = vsyncpa [#allocation5], 1

</llo_original>
